<compile_context>
chip_gen: v7x
topology: tpu7x:2x2x1
jax: 0.10.0
libtpu: 0.0.40
codegen_flags: <defaults>
</compile_context>

<pallas_src>
import functools

import jax
import jax.numpy as jnp
from jax import lax
from jax.experimental import pallas as pl
from jax.experimental.pallas import tpu as pltpu

PAD = 0


def _round_up(x, m):
    return (x + m - 1) // m * m


# ---------------------------------------------------------------------------
# Fused kernel: per grid step = (input projection for U time steps) + U GRU steps
# grid = (batch blocks [parallel], time blocks [arbitrary/sequential])
# ---------------------------------------------------------------------------
def _gru_kernel(maxlen_ref,                       # scalar prefetch (SMEM): (1,) int32
                emb_ref, len_ref, w_ih_ref, b_gi_ref, w_hh_ref, b_hn_ref,
                out_ref, hid_ref, h_scr):
    tblk = pl.program_id(1)
    U, BB, Hp = out_ref.shape
    H3 = w_hh_ref.shape[1]
    t0 = tblk * U

    @pl.when(tblk == 0)
    def _init():
        h_scr[...] = jnp.zeros_like(h_scr)

    max_len = maxlen_ref[0]

    # Trailing time block entirely past every sequence length: output is zero,
    # hidden stays frozen -> skip all MXU/EUP work.
    @pl.when(t0 >= max_len)
    def _skip():
        out_ref[...] = jnp.zeros_like(out_ref)

    @pl.when(t0 < max_len)
    def _run():
        # Fused (non-recurrent) input projection for the whole time block:
        # one lane/sublane-aligned bf16 MXU matmul, f32 accumulation.
        x = emb_ref[...].reshape(U * BB, Hp)                       # bf16, tile-aligned collapse
        gi = (jnp.dot(x, w_ih_ref[...],
                      preferred_element_type=jnp.float32)
              + b_gi_ref[...])                                     # (U*BB, 3Hp) f32

        w_hh = w_hh_ref[...]                                       # bf16, resident
        b_hn = jnp.broadcast_to(b_hn_ref[...], (BB, Hp))           # hoisted (no CSE in loop)
        len_tile = len_ref[...]                                    # (BB, Hp) int32

        h = h_scr[...]                                             # f32 hidden carry
        for u in range(U):                                         # unrolled recurrence
            gi_u = gi[u * BB:(u + 1) * BB]                         # static, tile-aligned slice
            gh = jnp.dot(h.astype(w_hh.dtype), w_hh,
                         preferred_element_type=jnp.float32)       # (BB, 3Hp) f32
            r = jax.nn.sigmoid(gi_u[:, :Hp] + gh[:, :Hp])
            z = jax.nn.sigmoid(gi_u[:, Hp:2 * Hp] + gh[:, Hp:2 * Hp])
            n = jnp.tanh(gi_u[:, 2 * Hp:] + r * (gh[:, 2 * Hp:] + b_hn))
            h_new = n + z * (h - n)                                # == (1-z)*n + z*h
            # pack_padded_sequence semantics: freeze h / zero output past length[b].
            valid = len_tile > (t0 + u)
            out_ref[u] = jnp.where(valid, h_new, 0.0).astype(out_ref.dtype)
            h = jnp.where(valid, h_new, h)
        h_scr[...] = h

    @pl.when(tblk == pl.num_programs(1) - 1)
    def _final():
        hid_ref[...] = h_scr[...].astype(hid_ref.dtype)


# ---------------------------------------------------------------------------
# Encoder.forward
# ---------------------------------------------------------------------------
@functools.partial(jax.jit, static_argnames=("U", "param_dtype"))
def encoder_forward(seqs, lengths, emb_table, w_ih, w_hh, b_ih, b_hh,
                    *, U=16, param_dtype=jnp.bfloat16):
    """seqs: (T, B) int32 token ids (PAD=0); lengths: (B,) int32.
    Returns (output (T, B, H), hidden (1, B, H)) matching nn.GRU with
    pack_padded_sequence / pad_packed_sequence (zeros past each length)."""
    T, B = seqs.shape
    V, H = emb_table.shape
    f32 = jnp.float32

    U = max(1, min(U, T))            # time steps per grid iteration
    Hp = _round_up(H, 128)           # lane-align each gate
    Bp = _round_up(B, 16)            # sublane-align batch for bf16 (16,128) tiles
    Tp = _round_up(T, U)
    H3 = 3 * Hp
    # v7x: split the batch across the two TensorCores when it is big enough.
    NB = 2 if Bp % 32 == 0 else 1
    BB = Bp // NB

    # ---- pad parameters per gate so each gate occupies a full 128-lane block ----
    def pad_w(w, dtype):             # (3H, H) -> (Hp, 3Hp): transposed, gate-blocked, padded
        out = jnp.zeros((Hp, H3), dtype)
        for g in range(3):
            out = out.at[:H, g * Hp:g * Hp + H].set(
                w[g * H:(g + 1) * H, :].T.astype(dtype))
        return out

    def pad_b(b):                    # (3H,) -> (3Hp,)
        out = jnp.zeros((H3,), f32)
        for g in range(3):
            out = out.at[g * Hp:g * Hp + H].set(b[g * H:(g + 1) * H].astype(f32))
        return out

    w_ih_t = pad_w(w_ih, param_dtype)
    w_hh_t = pad_w(w_hh, param_dtype)
    b_ih_p = pad_b(b_ih)
    b_hh_p = pad_b(b_hh)

    # Fold b_ih (all gates) + b_hh (r,z gates) into the fused projection bias.
    # b_hh for the n gate stays inside the tanh: n = tanh(i_n + b_in + r*(h_n + b_hn)).
    b_gi = (b_ih_p.at[:2 * Hp].add(b_hh_p[:2 * Hp])).reshape(1, H3)
    b_hn = b_hh_p[2 * Hp:].reshape(1, Hp)

    # ---- embedding lookup (XLA gather glue), zero-padded, bf16 activations ----
    table_p = jnp.zeros((V, Hp), param_dtype).at[:, :H].set(emb_table.astype(param_dtype))
    table_p = table_p.at[PAD].set(0)                     # padding_idx row is zero
    emb = jnp.zeros((Tp, Bp, Hp), param_dtype).at[:T, :B].set(table_p[seqs])

    # lengths: per-row threshold tile (time-invariant) + scalar-prefetched max length
    len_p = jnp.zeros((Bp,), jnp.int32).at[:B].set(lengths.astype(jnp.int32))
    len_tile = jnp.broadcast_to(len_p[:, None], (Bp, Hp))
    max_len = jnp.max(len_p).astype(jnp.int32).reshape((1,))

    nblk = Tp // U
    grid_spec = pltpu.PrefetchScalarGridSpec(
        num_scalar_prefetch=1,                            # max_len -> SMEM
        grid=(NB, nblk),
        in_specs=[
            pl.BlockSpec((U, BB, Hp), lambda b, t, ml: (t, b, 0)),   # emb time/batch block
            pl.BlockSpec((BB, Hp),    lambda b, t, ml: (b, 0)),      # lengths (time-invariant)
            pl.BlockSpec((Hp, H3),    lambda b, t, ml: (0, 0)),      # W_ih^T (resident)
            pl.BlockSpec((1, H3),     lambda b, t, ml: (0, 0)),      # fused bias
            pl.BlockSpec((Hp, H3),    lambda b, t, ml: (0, 0)),      # W_hh^T (resident)
            pl.BlockSpec((1, Hp),     lambda b, t, ml: (0, 0)),      # b_hh (n gate)
        ],
        out_specs=[
            pl.BlockSpec((U, BB, Hp), lambda b, t, ml: (t, b, 0)),   # output time/batch block
            pl.BlockSpec((BB, Hp),    lambda b, t, ml: (b, 0)),      # final hidden
        ],
        scratch_shapes=[pltpu.VMEM((BB, Hp), f32)],                  # hidden-state carry
    )

    # VMEM budget (double-buffered blocks + resident weights + in-kernel gi temp).
    pbytes = jnp.dtype(param_dtype).itemsize
    vmem_est = (2 * U * BB * Hp * pbytes        # emb block
                + 2 * BB * Hp * 4               # length tile
                + 2 * 2 * Hp * H3 * pbytes      # W_ih^T + W_hh^T
                + 2 * (H3 + Hp) * 4             # biases
                + 2 * U * BB * Hp * 4           # output block
                + 2 * BB * Hp * 4               # final hidden
                + BB * Hp * 4                   # h scratch
                + U * BB * H3 * 4)              # in-kernel gi temporary
    vmem_limit = int(min(max(vmem_est * 3 // 2, 32 * 1024 * 1024), 128 * 1024 * 1024))

    out_p, hid_p = pl.pallas_call(
        _gru_kernel,
        out_shape=(
            jax.ShapeDtypeStruct((Tp, Bp, Hp), f32),
            jax.ShapeDtypeStruct((Bp, Hp), f32),
        ),
        grid_spec=grid_spec,
        compiler_params=pltpu.CompilerParams(
            dimension_semantics=("parallel", "arbitrary"),  # batch-parallel, time-sequential
            vmem_limit_bytes=vmem_limit),
    )(max_len, emb, len_tile, w_ih_t, b_gi, w_hh_t, b_hn)

    return out_p[:T, :B, :H], hid_p[None, :B, :H]


# ---------------------------------------------------------------------------
# Pure-JAX f32 reference (same math, lax.scan over the original unpadded params)
# ---------------------------------------------------------------------------
def reference_forward(seqs, lengths, emb_table, w_ih, w_hh, b_ih, b_hh):
    T, B = seqs.shape
    H = emb_table.shape[1]
    emb = emb_table[seqs]
    w_ih_t, w_hh_t = w_ih.T, w_hh.T

    def step(h, xt):
        x, t = xt
        gi = x @ w_ih_t + b_ih
        gh = h @ w_hh_t + b_hh
        i_r, i_z, i_n = gi[:, :H], gi[:, H:2 * H], gi[:, 2 * H:]
        h_r, h_z, h_n = gh[:, :H], gh[:, H:2 * H], gh[:, 2 * H:]
        r = jax.nn.sigmoid(i_r + h_r)
        z = jax.nn.sigmoid(i_z + h_z)
        n = jnp.tanh(i_n + r * h_n)
        h_new = (1.0 - z) * n + z * h
        valid = (lengths > t)[:, None]
        h_next = jnp.where(valid, h_new, h)
        return h_next, jnp.where(valid, h_new, 0.0)

    h0 = jnp.zeros((B, H), jnp.float32)
    h_fin, outs = lax.scan(step, h0, (emb, jnp.arange(T, dtype=jnp.int32)))
    return outs, h_fin[None]


if __name__ == "__main__":
    # Small shapes consistent with Encoder.forward: seqs (T, B), hidden size H.
    T, B, H, V = 8, 4, 32, 16

    key = jax.random.PRNGKey(0)
    k_emb, k_wih, k_whh, k_bih, k_bhh, k_seq = jax.random.split(key, 6)

    # nn.Embedding(V, H, padding_idx=PAD): row PAD is zero.
    emb_table = jax.random.normal(k_emb, (V, H), jnp.float32)
    emb_table = emb_table.at[PAD].set(0.0)

    # nn.GRU(H, H) params, PyTorch init U(-1/sqrt(H), 1/sqrt(H)), gate order (r, z, n).
    s = 1.0 / jnp.sqrt(jnp.float32(H))
    w_ih = jax.random.uniform(k_wih, (3 * H, H), jnp.float32, -s, s)
    w_hh = jax.random.uniform(k_whh, (3 * H, H), jnp.float32, -s, s)
    b_ih = jax.random.uniform(k_bih, (3 * H,), jnp.float32, -s, s)
    b_hh = jax.random.uniform(k_bhh, (3 * H,), jnp.float32, -s, s)

    t_idx = jnp.arange(T, dtype=jnp.int32)[:, None]
    tol = dict(atol=5e-2, rtol=5e-2)   # bf16 weights/activations, f32 accumulation

    # Case 1: descending lengths filling the whole time axis.
    lengths1 = jnp.array([8, 6, 5, 3], dtype=jnp.int32)
    seqs1 = jax.random.randint(k_seq, (T, B), 1, V, dtype=jnp.int32)
    seqs1 = jnp.where(t_idx < lengths1[None, :], seqs1, PAD)
    out1, hid1 = encoder_forward(seqs1, lengths1, emb_table, w_ih, w_hh, b_ih, b_hh, U=4)
    out1 = jax.block_until_ready(out1); hid1 = jax.block_until_ready(hid1)
    ref_out1, ref_hid1 = reference_forward(seqs1, lengths1, emb_table, w_ih, w_hh, b_ih, b_hh)
    assert out1.shape == (T, B, H) and hid1.shape == (1, B, H)
    assert jnp.allclose(out1, ref_out1, **tol)
    assert jnp.allclose(hid1, ref_hid1, **tol)

    # Case 2: short lengths -> exercises the fully-padded time-block skip path.
    lengths2 = jnp.array([4, 3, 2, 1], dtype=jnp.int32)
    seqs2 = jnp.where(t_idx < lengths2[None, :], seqs1, PAD)
    out2, hid2 = encoder_forward(seqs2, lengths2, emb_table, w_ih, w_hh, b_ih, b_hh, U=4)
    out2 = jax.block_until_ready(out2); hid2 = jax.block_until_ready(hid2)
    ref_out2, ref_hid2 = reference_forward(seqs2, lengths2, emb_table, w_ih, w_hh, b_ih, b_hh)
    assert jnp.allclose(out2, ref_out2, **tol)
    assert jnp.allclose(hid2, ref_hid2, **tol)

    print("KERNEL_OK")
</pallas_src>

<mosaic_0001>
module attributes {stable_mosaic.version = 11 : i64} {
  func.func @_gru_kernel(%arg0: i32, %arg1: i32, %arg2: memref<1xi32, #tpu.memory_space<smem>>, %arg3: memref<4x16x128xbf16, #tpu.memory_space<vmem>>, %arg4: memref<16x128xi32, #tpu.memory_space<vmem>>, %arg5: memref<128x384xbf16, #tpu.memory_space<vmem>>, %arg6: memref<1x384xf32, #tpu.memory_space<vmem>>, %arg7: memref<128x384xbf16, #tpu.memory_space<vmem>>, %arg8: memref<1x128xf32, #tpu.memory_space<vmem>>, %arg9: memref<4x16x128xf32, #tpu.memory_space<vmem>>, %arg10: memref<16x128xf32, #tpu.memory_space<vmem>>, %arg11: memref<16x128xf32, #tpu.memory_space<vmem>>) attributes {dimension_semantics = [#tpu.dimension_semantics<parallel>, #tpu.dimension_semantics<arbitrary>], iteration_bounds = array<i64: 1, 2>, scalar_prefetch = 1 : i64, scratch_operands = 1 : i64, tpu.core_type = #tpu.core_type<tc>, window_params = [{transform_indices = @transform_0, window_bounds = array<i64: 4, 16, 128>}, {transform_indices = @transform_1, window_bounds = array<i64: 16, 128>}, {pipeline_mode = #tpu.pipeline_mode<synchronous>, transform_indices = @transform_2, window_bounds = array<i64: 128, 384>}, {pipeline_mode = #tpu.pipeline_mode<synchronous>, transform_indices = @transform_3, window_bounds = array<i64: 1, 384>}, {pipeline_mode = #tpu.pipeline_mode<synchronous>, transform_indices = @transform_4, window_bounds = array<i64: 128, 384>}, {pipeline_mode = #tpu.pipeline_mode<synchronous>, transform_indices = @transform_5, window_bounds = array<i64: 1, 128>}, {transform_indices = @transform_6, window_bounds = array<i64: 4, 16, 128>}, {transform_indices = @transform_7, window_bounds = array<i64: 16, 128>}]} {
    %c4_i32 = arith.constant 4 : i32
    %0 = arith.muli %arg1, %c4_i32 : i32
    %c0_i32 = arith.constant 0 : i32
    %1 = arith.cmpi eq, %arg1, %c0_i32 : i32
    %2 = arith.extui %1 : i1 to i32
    %c0_i32_0 = arith.constant 0 : i32
    %3 = arith.cmpi ne, %2, %c0_i32_0 : i32
    scf.if %3 {
      %cst = arith.constant 0.000000e+00 : f32
      %14 = vector.broadcast %cst : f32 to vector<16x128xf32>
      %c0_4 = arith.constant 0 : index
      %c0_5 = arith.constant 0 : index
      %15 = vector.load %arg11[%c0_4, %c0_5] : memref<16x128xf32, #tpu.memory_space<vmem>>, vector<16x128xf32>
      tpu.vector_store %arg11[%c0_4, %c0_5], %14 {strides = array<i32>} : memref<16x128xf32, #tpu.memory_space<vmem>>, vector<16x128xf32>,
    } else {
    }
    %c0 = arith.constant 0 : index
    %4 = memref.load %arg2[%c0] : memref<1xi32, #tpu.memory_space<smem>>
    %5 = arith.cmpi sge, %0, %4 : i32
    %6 = arith.extui %5 : i1 to i32
    %c0_i32_1 = arith.constant 0 : i32
    %7 = arith.cmpi ne, %6, %c0_i32_1 : i32
    scf.if %7 {
      %cst = arith.constant 0.000000e+00 : f32
      %14 = vector.broadcast %cst : f32 to vector<4x16x128xf32>
      %c0_4 = arith.constant 0 : index
      %c0_5 = arith.constant 0 : index
      %c0_6 = arith.constant 0 : index
      %15 = vector.load %arg9[%c0_4, %c0_5, %c0_6] : memref<4x16x128xf32, #tpu.memory_space<vmem>>, vector<4x16x128xf32>
      tpu.vector_store %arg9[%c0_4, %c0_5, %c0_6], %14 {strides = array<i32>} : memref<4x16x128xf32, #tpu.memory_space<vmem>>, vector<4x16x128xf32>,
    } else {
    }
    %8 = arith.cmpi slt, %0, %4 : i32
    %9 = arith.extui %8 : i1 to i32
    %c0_i32_2 = arith.constant 0 : i32
    %10 = arith.cmpi ne, %9, %c0_i32_2 : i32
    scf.if %10 {
      %c0_4 = arith.constant 0 : index
      %c0_5 = arith.constant 0 : index
      %c0_6 = arith.constant 0 : index
      %14 = vector.load %arg3[%c0_4, %c0_5, %c0_6] : memref<4x16x128xbf16, #tpu.memory_space<vmem>>, vector<4x16x128xbf16>
      %15 = vector.shape_cast %14 : vector<4x16x128xbf16> to vector<64x128xbf16>
      %c0_7 = arith.constant 0 : index
      %c0_8 = arith.constant 0 : index
      %16 = vector.load %arg5[%c0_7, %c0_8] : memref<128x384xbf16, #tpu.memory_space<vmem>>, vector<128x384xbf16>
      %cst = arith.constant dense<0.000000e+00> : vector<64x384xf32>
      %17 = tpu.matmul %15, %16, %cst {dimension_numbers = #tpu.dot_dimension_numbers<[1], [0], [0], [1], [0, 0, 1, 1], [], []>} : vector<64x128xbf16>, vector<128x384xbf16>, vector<64x384xf32> -> vector<64x384xf32>
      %c0_9 = arith.constant 0 : index
      %c0_10 = arith.constant 0 : index
      %18 = vector.load %arg6[%c0_9, %c0_10] : memref<1x384xf32, #tpu.memory_space<vmem>>, vector<1x384xf32>
      %19 = vector.broadcast %18 : vector<1x384xf32> to vector<64x384xf32>
      %20 = arith.addf %17, %19 : vector<64x384xf32>
      %c0_11 = arith.constant 0 : index
      %c0_12 = arith.constant 0 : index
      %21 = vector.load %arg7[%c0_11, %c0_12] : memref<128x384xbf16, #tpu.memory_space<vmem>>, vector<128x384xbf16>
      %c0_13 = arith.constant 0 : index
      %c0_14 = arith.constant 0 : index
      %22 = vector.load %arg8[%c0_13, %c0_14] : memref<1x128xf32, #tpu.memory_space<vmem>>, vector<1x128xf32>
      %23 = vector.shape_cast %22 : vector<1x128xf32> to vector<1x128xf32>
      %24 = vector.broadcast %23 : vector<1x128xf32> to vector<16x128xf32>
      %c0_15 = arith.constant 0 : index
      %c0_16 = arith.constant 0 : index
      %25 = vector.load %arg4[%c0_15, %c0_16] : memref<16x128xi32, #tpu.memory_space<vmem>>, vector<16x128xi32>
      %c0_17 = arith.constant 0 : index
      %c0_18 = arith.constant 0 : index
      %26 = vector.load %arg11[%c0_17, %c0_18] : memref<16x128xf32, #tpu.memory_space<vmem>>, vector<16x128xf32>
      %27 = vector.extract_strided_slice %20 {offsets = [0, 0], sizes = [16, 384], strides = [1, 1]} : vector<64x384xf32> to vector<16x384xf32>
      %28 = arith.truncf %26 : vector<16x128xf32> to vector<16x128xbf16>
      %cst_19 = arith.constant dense<0.000000e+00> : vector<16x384xf32>
      %29 = tpu.matmul %28, %21, %cst_19 {dimension_numbers = #tpu.dot_dimension_numbers<[1], [0], [0], [1], [0, 0, 1, 1], [], []>} : vector<16x128xbf16>, vector<128x384xbf16>, vector<16x384xf32> -> vector<16x384xf32>
      %30 = vector.extract_strided_slice %27 {offsets = [0, 0], sizes = [16, 128], strides = [1, 1]} : vector<16x384xf32> to vector<16x128xf32>
      %31 = vector.extract_strided_slice %29 {offsets = [0, 0], sizes = [16, 128], strides = [1, 1]} : vector<16x384xf32> to vector<16x128xf32>
      %32 = arith.addf %30, %31 : vector<16x128xf32>
      %33 = arith.negf %32 : vector<16x128xf32>
      %34 = math.exp %33 : vector<16x128xf32>
      %cst_20 = arith.constant 1.000000e+00 : f32
      %35 = vector.broadcast %cst_20 : f32 to vector<16x128xf32>
      %36 = arith.addf %35, %34 : vector<16x128xf32>
      %37 = arith.divf %35, %36 : vector<16x128xf32>
      %38 = vector.extract_strided_slice %27 {offsets = [0, 128], sizes = [16, 128], strides = [1, 1]} : vector<16x384xf32> to vector<16x128xf32>
      %39 = vector.extract_strided_slice %29 {offsets = [0, 128], sizes = [16, 128], strides = [1, 1]} : vector<16x384xf32> to vector<16x128xf32>
      %40 = arith.addf %38, %39 : vector<16x128xf32>
      %41 = arith.negf %40 : vector<16x128xf32>
      %42 = math.exp %41 : vector<16x128xf32>
      %cst_21 = arith.constant 1.000000e+00 : f32
      %43 = vector.broadcast %cst_21 : f32 to vector<16x128xf32>
      %44 = arith.addf %43, %42 : vector<16x128xf32>
      %45 = arith.divf %43, %44 : vector<16x128xf32>
      %46 = vector.extract_strided_slice %27 {offsets = [0, 256], sizes = [16, 128], strides = [1, 1]} : vector<16x384xf32> to vector<16x128xf32>
      %47 = vector.extract_strided_slice %29 {offsets = [0, 256], sizes = [16, 128], strides = [1, 1]} : vector<16x384xf32> to vector<16x128xf32>
      %48 = arith.addf %47, %24 : vector<16x128xf32>
      %49 = arith.mulf %37, %48 : vector<16x128xf32>
      %50 = arith.addf %46, %49 : vector<16x128xf32>
      %51 = math.tanh %50 : vector<16x128xf32>
      %52 = arith.subf %26, %51 : vector<16x128xf32>
      %53 = arith.mulf %45, %52 : vector<16x128xf32>
      %54 = arith.addf %51, %53 : vector<16x128xf32>
      %c0_i32_22 = arith.constant 0 : i32
      %55 = arith.addi %0, %c0_i32_22 : i32
      %56 = vector.broadcast %55 : i32 to vector<16x128xi32>
      %57 = arith.cmpi sgt, %25, %56 : vector<16x128xi32>
      %cst_23 = arith.constant 0.000000e+00 : f32
      %58 = vector.broadcast %cst_23 : f32 to vector<16x128xf32>
      %59 = arith.select %57, %54, %58 : vector<16x128xi1>, vector<16x128xf32>
      %c0_24 = arith.constant 0 : index
      %c0_25 = arith.constant 0 : index
      %c0_26 = arith.constant 0 : index
      %60 = vector.load %arg9[%c0_24, %c0_25, %c0_26] : memref<4x16x128xf32, #tpu.memory_space<vmem>>, vector<1x16x128xf32>
      %61 = vector.shape_cast %60 : vector<1x16x128xf32> to vector<16x128xf32>
      %62 = vector.shape_cast %59 : vector<16x128xf32> to vector<1x16x128xf32>
      tpu.vector_store %arg9[%c0_24, %c0_25, %c0_26], %62 {strides = array<i32>} : memref<4x16x128xf32, #tpu.memory_space<vmem>>, vector<1x16x128xf32>,
      %63 = arith.select %57, %54, %26 : vector<16x128xi1>, vector<16x128xf32>
      %64 = vector.extract_strided_slice %20 {offsets = [16, 0], sizes = [16, 384], strides = [1, 1]} : vector<64x384xf32> to vector<16x384xf32>
      %65 = arith.truncf %63 : vector<16x128xf32> to vector<16x128xbf16>
      %cst_27 = arith.constant dense<0.000000e+00> : vector<16x384xf32>
      %66 = tpu.matmul %65, %21, %cst_27 {dimension_numbers = #tpu.dot_dimension_numbers<[1], [0], [0], [1], [0, 0, 1, 1], [], []>} : vector<16x128xbf16>, vector<128x384xbf16>, vector<16x384xf32> -> vector<16x384xf32>
      %67 = vector.extract_strided_slice %64 {offsets = [0, 0], sizes = [16, 128], strides = [1, 1]} : vector<16x384xf32> to vector<16x128xf32>
      %68 = vector.extract_strided_slice %66 {offsets = [0, 0], sizes = [16, 128], strides = [1, 1]} : vector<16x384xf32> to vector<16x128xf32>
      %69 = arith.addf %67, %68 : vector<16x128xf32>
      %70 = arith.negf %69 : vector<16x128xf32>
      %71 = math.exp %70 : vector<16x128xf32>
      %cst_28 = arith.constant 1.000000e+00 : f32
      %72 = vector.broadcast %cst_28 : f32 to vector<16x128xf32>
      %73 = arith.addf %72, %71 : vector<16x128xf32>
      %74 = arith.divf %72, %73 : vector<16x128xf32>
      %75 = vector.extract_strided_slice %64 {offsets = [0, 128], sizes = [16, 128], strides = [1, 1]} : vector<16x384xf32> to vector<16x128xf32>
      %76 = vector.extract_strided_slice %66 {offsets = [0, 128], sizes = [16, 128], strides = [1, 1]} : vector<16x384xf32> to vector<16x128xf32>
      %77 = arith.addf %75, %76 : vector<16x128xf32>
      %78 = arith.negf %77 : vector<16x128xf32>
      %79 = math.exp %78 : vector<16x128xf32>
      %cst_29 = arith.constant 1.000000e+00 : f32
      %80 = vector.broadcast %cst_29 : f32 to vector<16x128xf32>
      %81 = arith.addf %80, %79 : vector<16x128xf32>
      %82 = arith.divf %80, %81 : vector<16x128xf32>
      %83 = vector.extract_strided_slice %64 {offsets = [0, 256], sizes = [16, 128], strides = [1, 1]} : vector<16x384xf32> to vector<16x128xf32>
      %84 = vector.extract_strided_slice %66 {offsets = [0, 256], sizes = [16, 128], strides = [1, 1]} : vector<16x384xf32> to vector<16x128xf32>
      %85 = arith.addf %84, %24 : vector<16x128xf32>
      %86 = arith.mulf %74, %85 : vector<16x128xf32>
      %87 = arith.addf %83, %86 : vector<16x128xf32>
      %88 = math.tanh %87 : vector<16x128xf32>
      %89 = arith.subf %63, %88 : vector<16x128xf32>
      %90 = arith.mulf %82, %89 : vector<16x128xf32>
      %91 = arith.addf %88, %90 : vector<16x128xf32>
      %c1_i32_30 = arith.constant 1 : i32
      %92 = arith.addi %0, %c1_i32_30 : i32
      %93 = vector.broadcast %92 : i32 to vector<16x128xi32>
      %94 = arith.cmpi sgt, %25, %93 : vector<16x128xi32>
      %cst_31 = arith.constant 0.000000e+00 : f32
      %95 = vector.broadcast %cst_31 : f32 to vector<16x128xf32>
      %96 = arith.select %94, %91, %95 : vector<16x128xi1>, vector<16x128xf32>
      %c1 = arith.constant 1 : index
      %c0_32 = arith.constant 0 : index
      %c0_33 = arith.constant 0 : index
      %97 = vector.load %arg9[%c1, %c0_32, %c0_33] : memref<4x16x128xf32, #tpu.memory_space<vmem>>, vector<1x16x128xf32>
      %98 = vector.shape_cast %97 : vector<1x16x128xf32> to vector<16x128xf32>
      %99 = vector.shape_cast %96 : vector<16x128xf32> to vector<1x16x128xf32>
      tpu.vector_store %arg9[%c1, %c0_32, %c0_33], %99 {strides = array<i32>} : memref<4x16x128xf32, #tpu.memory_space<vmem>>, vector<1x16x128xf32>,
      %100 = arith.select %94, %91, %63 : vector<16x128xi1>, vector<16x128xf32>
      %101 = vector.extract_strided_slice %20 {offsets = [32, 0], sizes = [16, 384], strides = [1, 1]} : vector<64x384xf32> to vector<16x384xf32>
      %102 = arith.truncf %100 : vector<16x128xf32> to vector<16x128xbf16>
      %cst_34 = arith.constant dense<0.000000e+00> : vector<16x384xf32>
      %103 = tpu.matmul %102, %21, %cst_34 {dimension_numbers = #tpu.dot_dimension_numbers<[1], [0], [0], [1], [0, 0, 1, 1], [], []>} : vector<16x128xbf16>, vector<128x384xbf16>, vector<16x384xf32> -> vector<16x384xf32>
      %104 = vector.extract_strided_slice %101 {offsets = [0, 0], sizes = [16, 128], strides = [1, 1]} : vector<16x384xf32> to vector<16x128xf32>
      %105 = vector.extract_strided_slice %103 {offsets = [0, 0], sizes = [16, 128], strides = [1, 1]} : vector<16x384xf32> to vector<16x128xf32>
      %106 = arith.addf %104, %105 : vector<16x128xf32>
      %107 = arith.negf %106 : vector<16x128xf32>
      %108 = math.exp %107 : vector<16x128xf32>
      %cst_35 = arith.constant 1.000000e+00 : f32
      %109 = vector.broadcast %cst_35 : f32 to vector<16x128xf32>
      %110 = arith.addf %109, %108 : vector<16x128xf32>
      %111 = arith.divf %109, %110 : vector<16x128xf32>
      %112 = vector.extract_strided_slice %101 {offsets = [0, 128], sizes = [16, 128], strides = [1, 1]} : vector<16x384xf32> to vector<16x128xf32>
      %113 = vector.extract_strided_slice %103 {offsets = [0, 128], sizes = [16, 128], strides = [1, 1]} : vector<16x384xf32> to vector<16x128xf32>
      %114 = arith.addf %112, %113 : vector<16x128xf32>
      %115 = arith.negf %114 : vector<16x128xf32>
      %116 = math.exp %115 : vector<16x128xf32>
      %cst_36 = arith.constant 1.000000e+00 : f32
      %117 = vector.broadcast %cst_36 : f32 to vector<16x128xf32>
      %118 = arith.addf %117, %116 : vector<16x128xf32>
      %119 = arith.divf %117, %118 : vector<16x128xf32>
      %120 = vector.extract_strided_slice %101 {offsets = [0, 256], sizes = [16, 128], strides = [1, 1]} : vector<16x384xf32> to vector<16x128xf32>
      %121 = vector.extract_strided_slice %103 {offsets = [0, 256], sizes = [16, 128], strides = [1, 1]} : vector<16x384xf32> to vector<16x128xf32>
      %122 = arith.addf %121, %24 : vector<16x128xf32>
      %123 = arith.mulf %111, %122 : vector<16x128xf32>
      %124 = arith.addf %120, %123 : vector<16x128xf32>
      %125 = math.tanh %124 : vector<16x128xf32>
      %126 = arith.subf %100, %125 : vector<16x128xf32>
      %127 = arith.mulf %119, %126 : vector<16x128xf32>
      %128 = arith.addf %125, %127 : vector<16x128xf32>
      %c2_i32 = arith.constant 2 : i32
      %129 = arith.addi %0, %c2_i32 : i32
      %130 = vector.broadcast %129 : i32 to vector<16x128xi32>
      %131 = arith.cmpi sgt, %25, %130 : vector<16x128xi32>
      %cst_37 = arith.constant 0.000000e+00 : f32
      %132 = vector.broadcast %cst_37 : f32 to vector<16x128xf32>
      %133 = arith.select %131, %128, %132 : vector<16x128xi1>, vector<16x128xf32>
      %c2 = arith.constant 2 : index
      %c0_38 = arith.constant 0 : index
      %c0_39 = arith.constant 0 : index
      %134 = vector.load %arg9[%c2, %c0_38, %c0_39] : memref<4x16x128xf32, #tpu.memory_space<vmem>>, vector<1x16x128xf32>
      %135 = vector.shape_cast %134 : vector<1x16x128xf32> to vector<16x128xf32>
      %136 = vector.shape_cast %133 : vector<16x128xf32> to vector<1x16x128xf32>
      tpu.vector_store %arg9[%c2, %c0_38, %c0_39], %136 {strides = array<i32>} : memref<4x16x128xf32, #tpu.memory_space<vmem>>, vector<1x16x128xf32>,
      %137 = arith.select %131, %128, %100 : vector<16x128xi1>, vector<16x128xf32>
      %138 = vector.extract_strided_slice %20 {offsets = [48, 0], sizes = [16, 384], strides = [1, 1]} : vector<64x384xf32> to vector<16x384xf32>
      %139 = arith.truncf %137 : vector<16x128xf32> to vector<16x128xbf16>
      %cst_40 = arith.constant dense<0.000000e+00> : vector<16x384xf32>
      %140 = tpu.matmul %139, %21, %cst_40 {dimension_numbers = #tpu.dot_dimension_numbers<[1], [0], [0], [1], [0, 0, 1, 1], [], []>} : vector<16x128xbf16>, vector<128x384xbf16>, vector<16x384xf32> -> vector<16x384xf32>
      %141 = vector.extract_strided_slice %138 {offsets = [0, 0], sizes = [16, 128], strides = [1, 1]} : vector<16x384xf32> to vector<16x128xf32>
      %142 = vector.extract_strided_slice %140 {offsets = [0, 0], sizes = [16, 128], strides = [1, 1]} : vector<16x384xf32> to vector<16x128xf32>
      %143 = arith.addf %141, %142 : vector<16x128xf32>
      %144 = arith.negf %143 : vector<16x128xf32>
      %145 = math.exp %144 : vector<16x128xf32>
      %cst_41 = arith.constant 1.000000e+00 : f32
      %146 = vector.broadcast %cst_41 : f32 to vector<16x128xf32>
      %147 = arith.addf %146, %145 : vector<16x128xf32>
      %148 = arith.divf %146, %147 : vector<16x128xf32>
      %149 = vector.extract_strided_slice %138 {offsets = [0, 128], sizes = [16, 128], strides = [1, 1]} : vector<16x384xf32> to vector<16x128xf32>
      %150 = vector.extract_strided_slice %140 {offsets = [0, 128], sizes = [16, 128], strides = [1, 1]} : vector<16x384xf32> to vector<16x128xf32>
      %151 = arith.addf %149, %150 : vector<16x128xf32>
      %152 = arith.negf %151 : vector<16x128xf32>
      %153 = math.exp %152 : vector<16x128xf32>
      %cst_42 = arith.constant 1.000000e+00 : f32
      %154 = vector.broadcast %cst_42 : f32 to vector<16x128xf32>
      %155 = arith.addf %154, %153 : vector<16x128xf32>
      %156 = arith.divf %154, %155 : vector<16x128xf32>
      %157 = vector.extract_strided_slice %138 {offsets = [0, 256], sizes = [16, 128], strides = [1, 1]} : vector<16x384xf32> to vector<16x128xf32>
      %158 = vector.extract_strided_slice %140 {offsets = [0, 256], sizes = [16, 128], strides = [1, 1]} : vector<16x384xf32> to vector<16x128xf32>
      %159 = arith.addf %158, %24 : vector<16x128xf32>
      %160 = arith.mulf %148, %159 : vector<16x128xf32>
      %161 = arith.addf %157, %160 : vector<16x128xf32>
      %162 = math.tanh %161 : vector<16x128xf32>
      %163 = arith.subf %137, %162 : vector<16x128xf32>
      %164 = arith.mulf %156, %163 : vector<16x128xf32>
      %165 = arith.addf %162, %164 : vector<16x128xf32>
      %c3_i32 = arith.constant 3 : i32
      %166 = arith.addi %0, %c3_i32 : i32
      %167 = vector.broadcast %166 : i32 to vector<16x128xi32>
      %168 = arith.cmpi sgt, %25, %167 : vector<16x128xi32>
      %cst_43 = arith.constant 0.000000e+00 : f32
      %169 = vector.broadcast %cst_43 : f32 to vector<16x128xf32>
      %170 = arith.select %168, %165, %169 : vector<16x128xi1>, vector<16x128xf32>
      %c3 = arith.constant 3 : index
      %c0_44 = arith.constant 0 : index
      %c0_45 = arith.constant 0 : index
      %171 = vector.load %arg9[%c3, %c0_44, %c0_45] : memref<4x16x128xf32, #tpu.memory_space<vmem>>, vector<1x16x128xf32>
      %172 = vector.shape_cast %171 : vector<1x16x128xf32> to vector<16x128xf32>
      %173 = vector.shape_cast %170 : vector<16x128xf32> to vector<1x16x128xf32>
      tpu.vector_store %arg9[%c3, %c0_44, %c0_45], %173 {strides = array<i32>} : memref<4x16x128xf32, #tpu.memory_space<vmem>>, vector<1x16x128xf32>,
      %174 = arith.select %168, %165, %137 : vector<16x128xi1>, vector<16x128xf32>
      %c0_46 = arith.constant 0 : index
      %c0_47 = arith.constant 0 : index
      %175 = vector.load %arg11[%c0_46, %c0_47] : memref<16x128xf32, #tpu.memory_space<vmem>>, vector<16x128xf32>
      tpu.vector_store %arg11[%c0_46, %c0_47], %174 {strides = array<i32>} : memref<16x128xf32, #tpu.memory_space<vmem>>, vector<16x128xf32>,
    } else {
    }
    %c1_i32 = arith.constant 1 : i32
    %11 = arith.cmpi eq, %arg1, %c1_i32 : i32
    %12 = arith.extui %11 : i1 to i32
    %c0_i32_3 = arith.constant 0 : i32
    %13 = arith.cmpi ne, %12, %c0_i32_3 : i32
    scf.if %13 {
      %c0_4 = arith.constant 0 : index
      %c0_5 = arith.constant 0 : index
      %14 = vector.load %arg11[%c0_4, %c0_5] : memref<16x128xf32, #tpu.memory_space<vmem>>, vector<16x128xf32>
      %c0_6 = arith.constant 0 : index
      %c0_7 = arith.constant 0 : index
      %15 = vector.load %arg10[%c0_6, %c0_7] : memref<16x128xf32, #tpu.memory_space<vmem>>, vector<16x128xf32>
      tpu.vector_store %arg10[%c0_6, %c0_7], %14 {strides = array<i32>} : memref<16x128xf32, #tpu.memory_space<vmem>>, vector<16x128xf32>,
    } else {
    }
    return
  }
  func.func @transform_0(%arg0: i32, %arg1: i32, %arg2: memref<1xi32, #tpu.memory_space<smem>>) -> (i32, i32, i32) {
    %c0_i32 = arith.constant 0 : i32
    %c0_i32_0 = arith.constant 0 : i32
    return %arg1, %arg0, %c0_i32 : i32, i32, i32
  }
  func.func @transform_1(%arg0: i32, %arg1: i32, %arg2: memref<1xi32, #tpu.memory_space<smem>>) -> (i32, i32) {
    %c0_i32 = arith.constant 0 : i32
    %c0_i32_0 = arith.constant 0 : i32
    return %arg0, %c0_i32 : i32, i32
  }
  func.func @transform_2(%arg0: i32, %arg1: i32, %arg2: memref<1xi32, #tpu.memory_space<smem>>) -> (i32, i32) {
    %c0_i32 = arith.constant 0 : i32
    %c0_i32_0 = arith.constant 0 : i32
    %c0_i32_1 = arith.constant 0 : i32
    return %c0_i32, %c0_i32_0 : i32, i32
  }
  func.func @transform_3(%arg0: i32, %arg1: i32, %arg2: memref<1xi32, #tpu.memory_space<smem>>) -> (i32, i32) {
    %c0_i32 = arith.constant 0 : i32
    %c0_i32_0 = arith.constant 0 : i32
    %c0_i32_1 = arith.constant 0 : i32
    return %c0_i32, %c0_i32_0 : i32, i32
  }
  func.func @transform_4(%arg0: i32, %arg1: i32, %arg2: memref<1xi32, #tpu.memory_space<smem>>) -> (i32, i32) {
    %c0_i32 = arith.constant 0 : i32
    %c0_i32_0 = arith.constant 0 : i32
    %c0_i32_1 = arith.constant 0 : i32
    return %c0_i32, %c0_i32_0 : i32, i32
  }
  func.func @transform_5(%arg0: i32, %arg1: i32, %arg2: memref<1xi32, #tpu.memory_space<smem>>) -> (i32, i32) {
    %c0_i32 = arith.constant 0 : i32
    %c0_i32_0 = arith.constant 0 : i32
    %c0_i32_1 = arith.constant 0 : i32
    return %c0_i32, %c0_i32_0 : i32, i32
  }
  func.func @transform_6(%arg0: i32, %arg1: i32, %arg2: memref<1xi32, #tpu.memory_space<smem>>) -> (i32, i32, i32) {
    %c0_i32 = arith.constant 0 : i32
    %c0_i32_0 = arith.constant 0 : i32
    return %arg1, %arg0, %c0_i32 : i32, i32, i32
  }
  func.func @transform_7(%arg0: i32, %arg1: i32, %arg2: memref<1xi32, #tpu.memory_space<smem>>) -> (i32, i32) {
    %c0_i32 = arith.constant 0 : i32
    %c0_i32_0 = arith.constant 0 : i32
    return %arg0, %c0_i32 : i32, i32
  }
}

</mosaic_0001>

<llo_original>
// kernel: encoder_forward.1
$region0: #{encoder_forward.1}
  #allocation0 [shape = 'u32[]', space=smem, size = 0x4, offset = 0x4, fixed_abs, tag = 'smem constant byte address 0x4 - core index']
  #allocation1 [shape = 'u32[144,128]{1,0:T(1,128)}', space=vmem, size = 0x12000, scoped, tag = 'internal scratch']
  #allocation2 [shape = 'f32[16,128]{1,0:T(8,128)}', space=vmem, size = 0x2000, scoped, tag = 'scratch operand']
  #allocation3 [shape = 's32[1]{0}', space=sflag, size = 0x4, scoped, tag = 'scoped memory for encoder_forward.1']
  #allocation4 [shape = 's32[1]{0:T(128)S(6)}', space=smem, size = 0x200, scoped, tag = 'prefetched SMEM operand 0']
  %s0 = inlined_call_operand.<no memory space> [shape: s32[1], index: 0, kind: input, shape index: {}]
  %s1 = inlined_call_operand.vmem [shape: bf16[8,16,128], index: 1, kind: input, shape index: {}]
  %s2 = inlined_call_operand.vmem [shape: s32[16,128], index: 2, kind: input, shape index: {}]
  %s3 = inlined_call_operand.vmem [shape: bf16[128,384], index: 3, kind: input, shape index: {}]
  %s4 = inlined_call_operand.vmem [shape: f32[1,384], index: 4, kind: input, shape index: {}]
  %s5 = inlined_call_operand.vmem [shape: bf16[128,384], index: 5, kind: input, shape index: {}]
  %s6 = inlined_call_operand.vmem [shape: f32[1,128], index: 6, kind: input, shape index: {}]
  %s7 = inlined_call_operand.vmem [shape: f32[8,16,128], index: 7, kind: output, shape index: {0}]
  %s8 = inlined_call_operand.vmem [shape: f32[16,128], index: 8, kind: output, shape index: {1}]
  %9 = xla_tuple %s7, %s8
  %s10 = sld [smem:[#allocation0]]
  $region81: #{encoder_forward.1} parent=0
    _
  %s12 = ssub.s32 1, %s10
  %s13 = scalar_select 0, %s12, %s10
  %14 = sst [smem:[#allocation4]] %s0
  loop: start=0, step=1, limit=4
  $region2: #{encoder_forward.1} parent=0 // loop_pre_header
    _
  $region3: #{encoder_forward.1} parent=0 // loop_header
    %s16 = sphi 0, %s20
    %p17 = scmp.ge.s32.totalorder %s16, 4
    %s23 = sphi 0, %s35
    %s24 = sphi 0, %s31
    %s25 = sphi 0, %s23
    %s26 = sphi 0, %s24
    %s27 = sphi 0, %s25
    %s28 = sphi 0, %s26
    %s40 = sphi 0, %s42
    %s43 = sphi 0, %s40
    %s44 = sphi 0, %s43
    %s60 = sphi 0, %s44
    %s66 = sphi 0, %s68
    %s69 = sphi 0, %s66
    %s70 = sphi 0, %s69
    %s86 = sphi 0, %s70
    %s90 = sphi 0, %s90
    %s92 = sphi 0, %s90
    %s93 = sphi 0, %s92
    %s107 = sphi 0, %s93
    %s111 = sphi 0, %s111
    %s113 = sphi 0, %s111
    %s114 = sphi 0, %s113
    %s128 = sphi 0, %s114
    %s132 = sphi 0, %s132
    %s134 = sphi 0, %s132
    %s135 = sphi 0, %s134
    %s149 = sphi 0, %s135
    %s153 = sphi 0, %s153
    %s155 = sphi 0, %s153
    %s156 = sphi 0, %s155
    %s170 = sphi 0, %s156
    %s178 = sphi 0, %s180
    %s181 = sphi 0, %s178
    %s182 = sphi 0, %s181
    %s198 = sphi 0, %s182
    %s204 = sphi 0, %s206
    %s207 = sphi 0, %s204
    %s208 = sphi 0, %s207
    %s224 = sphi 0, %s208
  $region4: #{encoder_forward.1} parent=0 // loop_header_branch
    %19 = sbr.rel (%p17) target = $region8
  $region5: #{encoder_forward.1} parent=0 // loop_body
    %s21 = ssub.s32 %s16, 1
    %s22 = ssub.s32 %s16, 2
    %s29 = sadd.s32 1, %s24
    %p30 = scmp.ge.s32.totalorder %s29, 2
    %s31 = scalar_select %p30, 0, %s29
    %s32 = sadd.s32 1, %s23
    %s33 = scalar_select %p30, %s32, %s23
    %p34 = scmp.ge.s32.totalorder %s33, 1
    %s35 = scalar_select %p34, 0, %s33
    %s36 = ssub.s32 %s24, %s31
    %s37 = ssub.s32 %s23, %s35
    %s38 = sor.u32 %s36, %s37
    %p39 = scmp.eq.s32.totalorder %s38, 0
    %s41 = sadd.s32 %s40, 1
    %s42 = scalar_select %p39, %s40, %s41
    %p45 = pneg %p39
    %p46 = scmp.eq.s32.totalorder %s16, 1
    %p47 = por %p45, %p46
    %p48 = scmp.ne.s32.totalorder %s40, %s43
    %p49 = scmp.eq.s32.totalorder %s16, 0
    %p50 = por %p48, %p49
    %p51 = scmp.ne.s32.totalorder %s40, %s43
    %p52 = scmp.eq.s32.totalorder %s21, 1
    %p53 = por %p51, %p52
    %p54 = scmp.ne.s32.totalorder %s43, %s44
    %p55 = scmp.eq.s32.totalorder %s21, 0
    %p56 = por %p54, %p55
    %p57 = scmp.ne.s32.totalorder %s43, %s44
    %p58 = scmp.eq.s32.totalorder %s22, 1
    %p59 = por %p57, %p58
    %p61 = scmp.ne.s32.totalorder %s44, %s60
    %p62 = scmp.eq.s32.totalorder %s22, 0
    %p63 = por %p61, %p62
    %s64 = ssub.s32 %s23, %s35
    %p65 = scmp.eq.s32.totalorder %s64, 0
    %s67 = sadd.s32 %s66, 1
    %s68 = scalar_select %p65, %s66, %s67
    %p71 = pneg %p65
    %p72 = scmp.eq.s32.totalorder %s16, 1
    %p73 = por %p71, %p72
    %p74 = scmp.ne.s32.totalorder %s66, %s69
    %p75 = scmp.eq.s32.totalorder %s16, 0
    %p76 = por %p74, %p75
    %p77 = scmp.ne.s32.totalorder %s66, %s69
    %p78 = scmp.eq.s32.totalorder %s21, 1
    %p79 = por %p77, %p78
    %p80 = scmp.ne.s32.totalorder %s69, %s70
    %p81 = scmp.eq.s32.totalorder %s21, 0
    %p82 = por %p80, %p81
    %p83 = scmp.ne.s32.totalorder %s69, %s70
    %p84 = scmp.eq.s32.totalorder %s22, 1
    %p85 = por %p83, %p84
    %p87 = scmp.ne.s32.totalorder %s70, %s86
    %p88 = scmp.eq.s32.totalorder %s22, 0
    %p89 = por %p87, %p88
    %s91 = sadd.s32 %s90, 1
    %p94 = scmp.eq.s32.totalorder %s16, 1
    %p95 = scmp.ne.s32.totalorder %s90, %s92
    %p96 = scmp.eq.s32.totalorder %s16, 0
    %p97 = por %p95, %p96
    %p98 = scmp.ne.s32.totalorder %s90, %s92
    %p99 = scmp.eq.s32.totalorder %s21, 1
    %p100 = por %p98, %p99
    %p101 = scmp.ne.s32.totalorder %s92, %s93
    %p102 = scmp.eq.s32.totalorder %s21, 0
    %p103 = por %p101, %p102
    %p104 = scmp.ne.s32.totalorder %s92, %s93
    %p105 = scmp.eq.s32.totalorder %s22, 1
    %p106 = por %p104, %p105
    %p108 = scmp.ne.s32.totalorder %s93, %s107
    %p109 = scmp.eq.s32.totalorder %s22, 0
    %p110 = por %p108, %p109
    %s112 = sadd.s32 %s111, 1
    %p115 = scmp.eq.s32.totalorder %s16, 1
    %p116 = scmp.ne.s32.totalorder %s111, %s113
    %p117 = scmp.eq.s32.totalorder %s16, 0
    %p118 = por %p116, %p117
    %p119 = scmp.ne.s32.totalorder %s111, %s113
    %p120 = scmp.eq.s32.totalorder %s21, 1
    %p121 = por %p119, %p120
    %p122 = scmp.ne.s32.totalorder %s113, %s114
    %p123 = scmp.eq.s32.totalorder %s21, 0
    %p124 = por %p122, %p123
    %p125 = scmp.ne.s32.totalorder %s113, %s114
    %p126 = scmp.eq.s32.totalorder %s22, 1
    %p127 = por %p125, %p126
    %p129 = scmp.ne.s32.totalorder %s114, %s128
    %p130 = scmp.eq.s32.totalorder %s22, 0
    %p131 = por %p129, %p130
    %s133 = sadd.s32 %s132, 1
    %p136 = scmp.eq.s32.totalorder %s16, 1
    %p137 = scmp.ne.s32.totalorder %s132, %s134
    %p138 = scmp.eq.s32.totalorder %s16, 0
    %p139 = por %p137, %p138
    %p140 = scmp.ne.s32.totalorder %s132, %s134
    %p141 = scmp.eq.s32.totalorder %s21, 1
    %p142 = por %p140, %p141
    %p143 = scmp.ne.s32.totalorder %s134, %s135
    %p144 = scmp.eq.s32.totalorder %s21, 0
    %p145 = por %p143, %p144
    %p146 = scmp.ne.s32.totalorder %s134, %s135
    %p147 = scmp.eq.s32.totalorder %s22, 1
    %p148 = por %p146, %p147
    %p150 = scmp.ne.s32.totalorder %s135, %s149
    %p151 = scmp.eq.s32.totalorder %s22, 0
    %p152 = por %p150, %p151
    %s154 = sadd.s32 %s153, 1
    %p157 = scmp.eq.s32.totalorder %s16, 1
    %p158 = scmp.ne.s32.totalorder %s153, %s155
    %p159 = scmp.eq.s32.totalorder %s16, 0
    %p160 = por %p158, %p159
    %p161 = scmp.ne.s32.totalorder %s153, %s155
    %p162 = scmp.eq.s32.totalorder %s21, 1
    %p163 = por %p161, %p162
    %p164 = scmp.ne.s32.totalorder %s155, %s156
    %p165 = scmp.eq.s32.totalorder %s21, 0
    %p166 = por %p164, %p165
    %p167 = scmp.ne.s32.totalorder %s155, %s156
    %p168 = scmp.eq.s32.totalorder %s22, 1
    %p169 = por %p167, %p168
    %p171 = scmp.ne.s32.totalorder %s156, %s170
    %p172 = scmp.eq.s32.totalorder %s22, 0
    %p173 = por %p171, %p172
    %s174 = ssub.s32 %s24, %s31
    %s175 = ssub.s32 %s23, %s35
    %s176 = sor.u32 %s174, %s175
    %p177 = scmp.eq.s32.totalorder %s176, 0
    %s179 = sadd.s32 %s178, 1
    %s180 = scalar_select %p177, %s178, %s179
    %p183 = pneg %p177
    %p184 = scmp.eq.s32.totalorder %s16, 1
    %p185 = por %p183, %p184
    %p186 = scmp.ne.s32.totalorder %s178, %s181
    %p187 = scmp.eq.s32.totalorder %s16, 0
    %p188 = por %p186, %p187
    %p189 = scmp.ne.s32.totalorder %s178, %s181
    %p190 = scmp.eq.s32.totalorder %s21, 1
    %p191 = por %p189, %p190
    %p192 = scmp.ne.s32.totalorder %s181, %s182
    %p193 = scmp.eq.s32.totalorder %s21, 0
    %p194 = por %p192, %p193
    %p195 = scmp.ne.s32.totalorder %s181, %s182
    %p196 = scmp.eq.s32.totalorder %s22, 1
    %p197 = por %p195, %p196
    %p199 = scmp.ne.s32.totalorder %s182, %s198
    %p200 = scmp.eq.s32.totalorder %s22, 0
    %p201 = por %p199, %p200
    %s202 = ssub.s32 %s23, %s35
    %p203 = scmp.eq.s32.totalorder %s202, 0
    %s205 = sadd.s32 %s204, 1
    %s206 = scalar_select %p203, %s204, %s205
    %p209 = pneg %p203
    %p210 = scmp.eq.s32.totalorder %s16, 1
    %p211 = por %p209, %p210
    %p212 = scmp.ne.s32.totalorder %s204, %s207
    %p213 = scmp.eq.s32.totalorder %s16, 0
    %p214 = por %p212, %p213
    %p215 = scmp.ne.s32.totalorder %s204, %s207
    %p216 = scmp.eq.s32.totalorder %s21, 1
    %p217 = por %p215, %p216
    %p218 = scmp.ne.s32.totalorder %s207, %s208
    %p219 = scmp.eq.s32.totalorder %s21, 0
    %p220 = por %p218, %p219
    %p221 = scmp.ne.s32.totalorder %s207, %s208
    %p222 = scmp.eq.s32.totalorder %s22, 1
    %p223 = por %p221, %p222
    %p225 = scmp.ne.s32.totalorder %s208, %s224
    %p226 = scmp.eq.s32.totalorder %s22, 0
    %p227 = por %p225, %p226
    %p228 = scmp.le.s32.totalorder 1, %s16
    %p229 = scmp.lt.s32.totalorder %s16, 3
    %p230 = pnand %p228, %p229
    %p231 = pneg %p230
    // Predicated region
    $region9: #{encoder_forward.1} parent=5 // pred_check
      _
    $region10: #{encoder_forward.1} parent=5 // pred_check_branch
      %233 = sbr.rel (%p230) target = $region12
    $region11: #{encoder_forward.1} parent=5 // pred_region
      %s234 = ssub.s32 %s16, 1
      // Predicated region
      $region13: #{encoder_forward.1} parent=11 // pred_check
        %p235 = pneg %p82
      $region14: #{encoder_forward.1} parent=11 // pred_check_branch
        %237 = sbr.rel (%p235) target = $region16
      $region15: #{encoder_forward.1} parent=11 // pred_region
        %s238 = smul.u32 2, %s25
        %p239 = scmp.lt.s32.totalorder %s238, 1
        %s240 = scalar_select %p239, %s238, 1
        %s241 = smul.addr %s240, 8
        %s242 = scalar_lea.vmem %s2, %s241
        %s243 = smul.u32 2, %s25
      $region16: #{encoder_forward.1} parent=11 // pred_fallthru
        _
      // Predicated region
      $region17: #{encoder_forward.1} parent=11 // pred_check
        %p244 = pneg %p103
      $region18: #{encoder_forward.1} parent=11 // pred_check_branch
        %246 = sbr.rel (%p244) target = $region20
      $region19: #{encoder_forward.1} parent=11 // pred_region
        _
      $region20: #{encoder_forward.1} parent=11 // pred_fallthru
        _
      // Predicated region
      $region21: #{encoder_forward.1} parent=11 // pred_check
        %p247 = pneg %p124
      $region22: #{encoder_forward.1} parent=11 // pred_check_branch
        %249 = sbr.rel (%p247) target = $region24
      $region23: #{encoder_forward.1} parent=11 // pred_region
        _
      $region24: #{encoder_forward.1} parent=11 // pred_fallthru
        _
      // Predicated region
      $region25: #{encoder_forward.1} parent=11 // pred_check
        %p250 = pneg %p145
      $region26: #{encoder_forward.1} parent=11 // pred_check_branch
        %252 = sbr.rel (%p250) target = $region28
      $region27: #{encoder_forward.1} parent=11 // pred_region
        _
      $region28: #{encoder_forward.1} parent=11 // pred_fallthru
        _
      // Predicated region
      $region29: #{encoder_forward.1} parent=11 // pred_check
        %p253 = pneg %p166
      $region30: #{encoder_forward.1} parent=11 // pred_check_branch
        %255 = sbr.rel (%p253) target = $region32
      $region31: #{encoder_forward.1} parent=11 // pred_region
        _
      $region32: #{encoder_forward.1} parent=11 // pred_fallthru
        _
    $region12: #{encoder_forward.1} parent=5 // pred_fallthru
      _
    %p256 = scmp.lt.s32.totalorder %s16, 2
    // Predicated region
    $region33: #{encoder_forward.1} parent=5 // pred_check
      %p257 = pneg %p256
    $region34: #{encoder_forward.1} parent=5 // pred_check_branch
      %259 = sbr.rel (%p257) target = $region36
    $region35: #{encoder_forward.1} parent=5 // pred_region
      // Predicated region
      $region37: #{encoder_forward.1} parent=35 // pred_check
        %p260 = pneg %p50
      $region38: #{encoder_forward.1} parent=35 // pred_check_branch
        %262 = sbr.rel (%p260) target = $region40
      $region39: #{encoder_forward.1} parent=35 // pred_region
        %s263 = smul.u32 4, %s24
        %s264 = smul.u32 2, %s23
        %p265 = scmp.lt.s32.totalorder %s263, 7
        %s266 = scalar_select %p265, %s263, 7
        %p267 = scmp.lt.s32.totalorder %s264, 1
        %s268 = scalar_select %p267, %s264, 1
        %s269 = smul.addr %s266, 2
        %s270 = sadd.s32 %s268, %s269
        %s271 = smul.addr %s270, 4
        %s272 = scalar_lea.vmem %s1, %s271
        %s273 = smul.u32 4, %s24
        %s274 = smul.u32 2, %s23
      $region40: #{encoder_forward.1} parent=35 // pred_fallthru
        _
    $region36: #{encoder_forward.1} parent=5 // pred_fallthru
      _
    %p275 = scmp.le.s32.totalorder 1, %s16
    %p276 = scmp.lt.s32.totalorder %s16, 3
    %p277 = pnand %p275, %p276
    %p278 = pneg %p277
    // Predicated region
    $region41: #{encoder_forward.1} parent=5 // pred_check
      _
    $region42: #{encoder_forward.1} parent=5 // pred_check_branch
      %280 = sbr.rel (%p277) target = $region44
    $region43: #{encoder_forward.1} parent=5 // pred_region
      %s281 = ssub.s32 %s16, 1
      %s282 = smul.u32 4, %s26
      %s283 = smul.u32 2, %s25
      %p284 = scmp.lt.s32.totalorder %s282, 7
      %s285 = scalar_select %p284, %s282, 7
      %p286 = scmp.lt.s32.totalorder %s283, 1
      %s287 = scalar_select %p286, %s283, 1
      %s288 = smul.addr %s285, 2
      %s289 = sadd.s32 %s287, %s288
      %s290 = smul.addr %s289, 4
      %s291 = scalar_lea.vmem %s1, %s290
      %p292 = pneg %p56
      %p293 = pneg %p53
      %s294 = smul.u32 2, %s25
      %p295 = scmp.lt.s32.totalorder %s294, 1
      %s296 = scalar_select %p295, %s294, 1
      %s297 = smul.addr %s296, 8
      %s298 = scalar_lea.vmem %s2, %s297
      %p299 = pneg %p82
      %p300 = pneg %p79
      %p301 = pneg %p103
      %p302 = pneg %p100
      %p303 = pneg %p124
      %p304 = pneg %p121
      %p305 = pneg %p145
      %p306 = pneg %p142
      %p307 = pneg %p166
      %p308 = pneg %p163
      %p309 = pneg %p194
      %p310 = pneg %p191
      %s311 = smul.u32 4, %s26
      %s312 = smul.u32 2, %s25
      %p313 = scmp.lt.s32.totalorder %s311, 7
      %s314 = scalar_select %p313, %s311, 7
      %p315 = scmp.lt.s32.totalorder %s312, 1
      %s316 = scalar_select %p315, %s312, 1
      %s317 = smul.addr %s314, 2
      %s318 = sadd.s32 %s316, %s317
      %s319 = smul.addr %s318, 8
      %s320 = scalar_lea.vmem %s7, %s319
      %p321 = pneg %p220
      %p322 = pneg %p217
      %s323 = smul.u32 2, %s25
      %p324 = scmp.lt.s32.totalorder %s323, 1
      %s325 = scalar_select %p324, %s323, 1
      %s326 = smul.addr %s325, 8
      %s327 = scalar_lea.vmem %s8, %s326
      %s328 = smul.u32 4, %s26
      %s329 = smul.u32 2, %s25
      %p330 = scmp.lt.s32.totalorder %s328, 7
      %s331 = scalar_select %p330, %s328, 7
      %p332 = scmp.lt.s32.totalorder %s329, 1
      %s333 = scalar_select %p332, %s329, 1
      %s334 = smul.addr %s331, 2
      %s335 = sadd.s32 %s333, %s334
      %s336 = smul.addr %s335, 4
      %s337 = scalar_lea.vmem %s1, %s336
      %s338 = smul.u32 4, %s26
      %s339 = smul.u32 2, %s25
      %s340 = smul.u32 2, %s25
      %p341 = scmp.lt.s32.totalorder %s340, 1
      %s342 = scalar_select %p341, %s340, 1
      %s343 = smul.addr %s342, 8
      %s344 = scalar_lea.vmem %s2, %s343
      %s345 = smul.u32 2, %s25
      %s346 = smul.u32 4, %s26
      %s347 = smul.u32 2, %s25
      %p348 = scmp.lt.s32.totalorder %s346, 7
      %s349 = scalar_select %p348, %s346, 7
      %p350 = scmp.lt.s32.totalorder %s347, 1
      %s351 = scalar_select %p350, %s347, 1
      %s352 = smul.addr %s349, 2
      %s353 = sadd.s32 %s351, %s352
      %s354 = smul.addr %s353, 8
      %s355 = scalar_lea.vmem %s7, %s354
      %s356 = smul.u32 4, %s26
      %s357 = smul.u32 2, %s25
      %s358 = smul.u32 2, %s25
      %p359 = scmp.lt.s32.totalorder %s358, 1
      %s360 = scalar_select %p359, %s358, 1
      %s361 = smul.addr %s360, 8
      %s362 = scalar_lea.vmem %s8, %s361
      %s363 = smul.u32 2, %s25
      %s365 = smul.u32 %s26, 4
      %p366 = scmp.eq.s32.totalorder %s26, 0
      // Predicated region
      $region45: #{encoder_forward.1} parent=43 // pred_check
        %p367 = pneg %p366
      $region46: #{encoder_forward.1} parent=43 // pred_check_branch
        %369 = sbr.rel (%p367) target = $region48
      $region47: #{encoder_forward.1} parent=43 // pred_region
        %370 = vst [vmem:[#allocation2] sm:$0xff] 0.0
        %371 = vst [vmem:[#allocation2 + $0x8] sm:$0xff] 0.0
      $region48: #{encoder_forward.1} parent=43 // pred_fallthru
        _
      %s372 = sld [smem:[#allocation4]]
      %p373 = scmp.ge.s32.totalorder %s365, %s372
      // Predicated region
      $region49: #{encoder_forward.1} parent=43 // pred_check
        %p374 = pneg %p373
      $region50: #{encoder_forward.1} parent=43 // pred_check_branch
        %376 = sbr.rel (%p374) target = $region52
      $region51: #{encoder_forward.1} parent=43 // pred_region
        %377 = vst [vmem:[%s355] sm:$0xff] 0.0
        %378 = vst [vmem:[%s355 + $0x8] sm:$0xff] 0.0
        %379 = vst [vmem:[%s355 + $0x10] sm:$0xff] 0.0
        %380 = vst [vmem:[%s355 + $0x18] sm:$0xff] 0.0
        %381 = vst [vmem:[%s355 + $0x20] sm:$0xff] 0.0
        %382 = vst [vmem:[%s355 + $0x28] sm:$0xff] 0.0
        %383 = vst [vmem:[%s355 + $0x30] sm:$0xff] 0.0
        %384 = vst [vmem:[%s355 + $0x38] sm:$0xff] 0.0
      $region52: #{encoder_forward.1} parent=43 // pred_fallthru
        _
      %p385 = scmp.lt.s32.totalorder %s365, %s372
      // Predicated region
      $region53: #{encoder_forward.1} parent=43 // pred_check
        %p386 = pneg %p385
      $region54: #{encoder_forward.1} parent=43 // pred_check_branch
        %388 = sbr.rel (%p386) target = $region56
      $region55: #{encoder_forward.1} parent=43 // pred_region
        %v389 = vld [vmem:[%s337] sm:$0xf]
        %v390 = vld [vmem:[%s337 + $0x4] sm:$0xf]
        %v391 = vld [vmem:[%s337 + $0x8] sm:$0xf]
        %v392 = vld [vmem:[%s337 + $0xc] sm:$0xf]
        %v393 = vld [vmem:[%s337 + $0x10] sm:$0xf]
        %v394 = vld [vmem:[%s337 + $0x14] sm:$0xf]
        %v395 = vld [vmem:[%s337 + $0x18] sm:$0xf]
        %v396 = vld [vmem:[%s337 + $0x1c] sm:$0xf]
        %v397 = vld [vmem:[%s3] sm:$0xff]
        %v398 = vld [vmem:[%s3 + $0x8] sm:$0xf]
        %v399 = vld [vmem:[%s3 + $0xc] sm:$0xff]
        %v400 = vld [vmem:[%s3 + $0x14] sm:$0xf]
        %v401 = vld [vmem:[%s3 + $0x18] sm:$0xff]
        %v402 = vld [vmem:[%s3 + $0x20] sm:$0xf]
        %v403 = vld [vmem:[%s3 + $0x24] sm:$0xff]
        %v404 = vld [vmem:[%s3 + $0x2c] sm:$0xf]
        %v405 = vld [vmem:[%s3 + $0x30] sm:$0xff]
        %v406 = vld [vmem:[%s3 + $0x38] sm:$0xf]
        %v407 = vld [vmem:[%s3 + $0x3c] sm:$0xff]
        %v408 = vld [vmem:[%s3 + $0x44] sm:$0xf]
        %v409 = vld [vmem:[%s3 + $0x48] sm:$0xff]
        %v410 = vld [vmem:[%s3 + $0x50] sm:$0xf]
        %v411 = vld [vmem:[%s3 + $0x54] sm:$0xff]
        %v412 = vld [vmem:[%s3 + $0x5c] sm:$0xf]
        %v413 = vld [vmem:[%s3 + $0x60] sm:$0xff]
        %v414 = vld [vmem:[%s3 + $0x68] sm:$0xf]
        %v415 = vld [vmem:[%s3 + $0x6c] sm:$0xff]
        %v416 = vld [vmem:[%s3 + $0x74] sm:$0xf]
        %v417 = vld [vmem:[%s3 + $0x78] sm:$0xff]
        %v418 = vld [vmem:[%s3 + $0x80] sm:$0xf]
        %v419 = vld [vmem:[%s3 + $0x84] sm:$0xff]
        %v420 = vld [vmem:[%s3 + $0x8c] sm:$0xf]
        %v421 = vld [vmem:[%s3 + $0x90] sm:$0xff]
        %v422 = vld [vmem:[%s3 + $0x98] sm:$0xf]
        %v423 = vld [vmem:[%s3 + $0x9c] sm:$0xff]
        %v424 = vld [vmem:[%s3 + $0xa4] sm:$0xf]
        %v425 = vld [vmem:[%s3 + $0xa8] sm:$0xff]
        %v426 = vld [vmem:[%s3 + $0xb0] sm:$0xf]
        %v427 = vld [vmem:[%s3 + $0xb4] sm:$0xff]
        %v428 = vld [vmem:[%s3 + $0xbc] sm:$0xf]
        %v429 = vld [vmem:[%s4] sm:$0x7]
        %v431 = vlaneseq
        %v432 = vshrl.u32 %v431, 7
        %v433 = vsub.s32 0, %v432
        %v434 = vrot.slane %v429, %v433
        %v435 = vlaneseq
        %v436 = vshrl.u32 %v435, 7
        %v437 = vsub.s32 1, %v436
        %v438 = vrot.slane %v429, %v437
        %v439 = vlaneseq
        %v440 = vshrl.u32 %v439, 7
        %v441 = vsub.s32 2, %v440
        %v442 = vrot.slane %v429, %v441
        %v454 = vunpack.c.l.b16 %v389
        %v455 = vunpack.c.l.b16 %v390
        %v456 = vunpack.c.l.b16 %v391
        %v457 = vunpack.c.l.b16 %v392
        %v458 = vunpack.c.l.b16 %v393
        %v459 = vunpack.c.l.b16 %v394
        %v460 = vunpack.c.l.b16 %v395
        %v461 = vunpack.c.l.b16 %v396
        %v462 = vpack.c.b16 %v455, %v454
        %v463 = vpack.c.b16 %v457, %v456
        %v464 = vpack.c.b16 %v459, %v458
        %v465 = vpack.c.b16 %v461, %v460
        %v502 = vunpack.c.l.b16 %v397
        %v503 = vunpack.c.h.b16 %v397
        %v504 = vunpack.c.l.b16 %v398
        %v505 = vunpack.c.l.b16 %v399
        %v506 = vunpack.c.h.b16 %v399
        %v507 = vunpack.c.l.b16 %v400
        %v508 = vunpack.c.l.b16 %v401
        %v509 = vunpack.c.h.b16 %v401
        %v510 = vunpack.c.l.b16 %v402
        %v511 = vunpack.c.l.b16 %v403
        %v512 = vunpack.c.h.b16 %v403
        %v513 = vunpack.c.l.b16 %v404
        %v514 = vunpack.c.l.b16 %v405
        %v515 = vunpack.c.h.b16 %v405
        %v516 = vunpack.c.l.b16 %v406
        %v517 = vunpack.c.l.b16 %v407
        %v518 = vunpack.c.h.b16 %v407
        %v519 = vunpack.c.l.b16 %v408
        %v520 = vunpack.c.l.b16 %v409
        %v521 = vunpack.c.h.b16 %v409
        %v522 = vunpack.c.l.b16 %v410
        %v523 = vunpack.c.l.b16 %v411
        %v524 = vunpack.c.h.b16 %v411
        %v525 = vunpack.c.l.b16 %v412
        %v526 = vunpack.c.l.b16 %v413
        %v527 = vunpack.c.h.b16 %v413
        %v528 = vunpack.c.l.b16 %v414
        %v529 = vunpack.c.l.b16 %v415
        %v530 = vunpack.c.h.b16 %v415
        %v531 = vunpack.c.l.b16 %v416
        %v532 = vunpack.c.l.b16 %v417
        %v533 = vunpack.c.h.b16 %v417
        %v534 = vunpack.c.l.b16 %v418
        %v535 = vunpack.c.l.b16 %v419
        %v536 = vunpack.c.h.b16 %v419
        %v537 = vunpack.c.l.b16 %v420
        %v538 = vunpack.c.l.b16 %v421
        %v539 = vunpack.c.h.b16 %v421
        %v540 = vunpack.c.l.b16 %v422
        %v541 = vunpack.c.l.b16 %v423
        %v542 = vunpack.c.h.b16 %v423
        %v543 = vunpack.c.l.b16 %v424
        %v544 = vunpack.c.l.b16 %v425
        %v545 = vunpack.c.h.b16 %v425
        %v546 = vunpack.c.l.b16 %v426
        %v547 = vunpack.c.l.b16 %v427
        %v548 = vunpack.c.h.b16 %v427
        %v549 = vunpack.c.l.b16 %v428
        %v550 = vpack.c.b16 %v505, %v502
        %v551 = vpack.c.b16 %v506, %v503
        %v552 = vpack.c.b16 %v507, %v504
        %v553 = vpack.c.b16 %v511, %v508
        %v554 = vpack.c.b16 %v512, %v509
        %v555 = vpack.c.b16 %v513, %v510
        %v556 = vpack.c.b16 %v517, %v514
        %v557 = vpack.c.b16 %v518, %v515
        %v558 = vpack.c.b16 %v519, %v516
        %v559 = vpack.c.b16 %v523, %v520
        %v560 = vpack.c.b16 %v524, %v521
        %v561 = vpack.c.b16 %v525, %v522
        %v562 = vpack.c.b16 %v529, %v526
        %v563 = vpack.c.b16 %v530, %v527
        %v564 = vpack.c.b16 %v531, %v528
        %v565 = vpack.c.b16 %v535, %v532
        %v566 = vpack.c.b16 %v536, %v533
        %v567 = vpack.c.b16 %v537, %v534
        %v568 = vpack.c.b16 %v541, %v538
        %v569 = vpack.c.b16 %v542, %v539
        %v570 = vpack.c.b16 %v543, %v540
        %v571 = vpack.c.b16 %v547, %v544
        %v572 = vpack.c.b16 %v548, %v545
        %v573 = vpack.c.b16 %v549, %v546
        %598 = vmatprep.subr.bf16.mxu0 %v551
        %599 = vmatpush1.bf16.msra.mxu0 %v550
        %600 = vmatprep.subr.bf16.mxu0 %v554
        %601 = vmatpush1.bf16.msra.mxu0 %v553
        %602 = vmatprep.subr.bf16.mxu0 %v557
        %603 = vmatpush1.bf16.msra.mxu0 %v556
        %604 = vmatprep.subr.bf16.mxu0 %v560
        %605 = vmatpush1.bf16.msra.mxu0 %v559
        %606 = vmatprep.subr.bf16.mxu0 %v563
        %607 = vmatpush1.bf16.msra.mxu0 %v562
        %608 = vmatprep.subr.bf16.mxu0 %v566
        %609 = vmatpush1.bf16.msra.mxu0 %v565
        %610 = vmatprep.subr.bf16.mxu0 %v569
        %611 = vmatpush1.bf16.msra.mxu0 %v568
        %612 = vmatprep.subr.bf16.mxu0 %v572
        %613 = vmatpush1.bf16.msra.mxu0 %v571
        %614 = vmatprep.subr.bf16.mxu0 0
        %615 = vmatpush1.bf16.msra.mxu0 0
        %616 = vmatprep.subr.bf16.mxu0 0
        %617 = vmatpush1.bf16.msra.mxu0 0
        %618 = vmatprep.subr.bf16.mxu0 0
        %619 = vmatpush1.bf16.msra.mxu0 0
        %620 = vmatprep.subr.bf16.mxu0 0
        %621 = vmatpush1.bf16.msra.mxu0 0
        %622 = vmatprep.subr.bf16.mxu0 0
        %623 = vmatpush1.bf16.msra.mxu0 0
        %624 = vmatprep.subr.bf16.mxu0 0
        %625 = vmatpush1.bf16.msra.mxu0 0
        %626 = vmatprep.subr.bf16.mxu0 0
        %627 = vmatpush1.bf16.msra.mxu0 0
        %628 = vmatprep.subr.bf16.mxu0 0
        %629 = vmatpush1.bf16.msra.mxu0 0
        %630 = vmatprep.mubr.bf16.mxu0 0
        %631 = vmatmul.mubr.bf16.gmra.mrb[0].mxu0 %v462
        %v632 = vpop.f32.mrb[0].mxu0
        %v633 = vadd.f32 %v434, %v632
        %v634 = vpop.f32.mrb[0].mxu0
        %v635 = vadd.f32 %v438, %v634
        %v636 = vpop.f32.mrb[0].mxu0
        %v637 = vadd.f32 %v434, %v636
        %v638 = vpop.f32.mrb[0].mxu0
        %v639 = vadd.f32 %v438, %v638
        %640 = vmatprep.mubr.bf16.mxu0 0
        %641 = vmatmul.mubr.bf16.gmra.mrb[0].mxu0 %v463
        %v642 = vpop.f32.mrb[0].mxu0
        %v643 = vadd.f32 %v434, %v642
        %v644 = vpop.f32.mrb[0].mxu0
        %v645 = vadd.f32 %v438, %v644
        %v646 = vpop.f32.mrb[0].mxu0
        %v647 = vadd.f32 %v434, %v646
        %v648 = vpop.f32.mrb[0].mxu0
        %v649 = vadd.f32 %v438, %v648
        %650 = vmatprep.mubr.bf16.mxu0 0
        %651 = vmatmul.mubr.bf16.gmra.mrb[0].mxu0 %v464
        %v652 = vpop.f32.mrb[0].mxu0
        %v653 = vadd.f32 %v434, %v652
        %v654 = vpop.f32.mrb[0].mxu0
        %v655 = vadd.f32 %v438, %v654
        %v656 = vpop.f32.mrb[0].mxu0
        %v657 = vadd.f32 %v434, %v656
        %v658 = vpop.f32.mrb[0].mxu0
        %v659 = vadd.f32 %v438, %v658
        %660 = vmatprep.mubr.bf16.mxu0 0
        %661 = vmatmul.mubr.bf16.gmra.mrb[0].mxu0 %v465
        %v662 = vpop.f32.mrb[0].mxu0
        %v663 = vadd.f32 %v434, %v662
        %v664 = vpop.f32.mrb[0].mxu0
        %v665 = vadd.f32 %v438, %v664
        %v666 = vpop.f32.mrb[0].mxu0
        %v667 = vadd.f32 %v434, %v666
        %v668 = vpop.f32.mrb[0].mxu0
        %v669 = vadd.f32 %v438, %v668
        %670 = vdwg.mxu0
        %671 = vmatprep.subr.bf16.mxu0 0
        %672 = vmatpush1.bf16.msra.mxu0 %v552
        %673 = vmatprep.subr.bf16.mxu0 0
        %674 = vmatpush1.bf16.msra.mxu0 %v555
        %675 = vmatprep.subr.bf16.mxu0 0
        %676 = vmatpush1.bf16.msra.mxu0 %v558
        %677 = vmatprep.subr.bf16.mxu0 0
        %678 = vmatpush1.bf16.msra.mxu0 %v561
        %679 = vmatprep.subr.bf16.mxu0 0
        %680 = vmatpush1.bf16.msra.mxu0 %v564
        %681 = vmatprep.subr.bf16.mxu0 0
        %682 = vmatpush1.bf16.msra.mxu0 %v567
        %683 = vmatprep.subr.bf16.mxu0 0
        %684 = vmatpush1.bf16.msra.mxu0 %v570
        %685 = vmatprep.subr.bf16.mxu0 0
        %686 = vmatpush1.bf16.msra.mxu0 %v573
        %687 = vmatprep.subr.bf16.mxu0 0
        %688 = vmatpush1.bf16.msra.mxu0 0
        %689 = vmatprep.subr.bf16.mxu0 0
        %690 = vmatpush1.bf16.msra.mxu0 0
        %691 = vmatprep.subr.bf16.mxu0 0
        %692 = vmatpush1.bf16.msra.mxu0 0
        %693 = vmatprep.subr.bf16.mxu0 0
        %694 = vmatpush1.bf16.msra.mxu0 0
        %695 = vmatprep.subr.bf16.mxu0 0
        %696 = vmatpush1.bf16.msra.mxu0 0
        %697 = vmatprep.subr.bf16.mxu0 0
        %698 = vmatpush1.bf16.msra.mxu0 0
        %699 = vmatprep.subr.bf16.mxu0 0
        %700 = vmatpush1.bf16.msra.mxu0 0
        %701 = vmatprep.subr.bf16.mxu0 0
        %702 = vmatpush1.bf16.msra.mxu0 0
        %703 = vmatprep.mubr.bf16.mxu0 0
        %704 = vmatmul.mubr.bf16.gmra.mrb[0].mxu0 %v462
        %v705 = vpop.f32.mrb[0].mxu0
        %v706 = vadd.f32 %v442, %v705
        %v707 = vpop.f32.mrb[0].mxu0
        %v708 = vpop.f32.mrb[0].mxu0
        %v709 = vadd.f32 %v442, %v708
        %v710 = vpop.f32.mrb[0].mxu0
        %711 = vmatprep.mubr.bf16.mxu0 0
        %712 = vmatmul.mubr.bf16.gmra.mrb[0].mxu0 %v463
        %v713 = vpop.f32.mrb[0].mxu0
        %v714 = vadd.f32 %v442, %v713
        %v715 = vpop.f32.mrb[0].mxu0
        %v716 = vpop.f32.mrb[0].mxu0
        %v717 = vadd.f32 %v442, %v716
        %v718 = vpop.f32.mrb[0].mxu0
        %719 = vmatprep.mubr.bf16.mxu0 0
        %720 = vmatmul.mubr.bf16.gmra.mrb[0].mxu0 %v464
        %v721 = vpop.f32.mrb[0].mxu0
        %v722 = vadd.f32 %v442, %v721
        %v723 = vpop.f32.mrb[0].mxu0
        %v724 = vpop.f32.mrb[0].mxu0
        %v725 = vadd.f32 %v442, %v724
        %v726 = vpop.f32.mrb[0].mxu0
        %727 = vmatprep.mubr.bf16.mxu0 0
        %728 = vmatmul.mubr.bf16.gmra.mrb[0].mxu0 %v465
        %v729 = vpop.f32.mrb[0].mxu0
        %v730 = vadd.f32 %v442, %v729
        %v731 = vpop.f32.mrb[0].mxu0
        %v732 = vpop.f32.mrb[0].mxu0
        %v733 = vadd.f32 %v442, %v732
        %v734 = vpop.f32.mrb[0].mxu0
        %735 = vdwg.mxu0
        %v736 = vld [vmem:[%s5] sm:$0xff]
        %v737 = vld [vmem:[%s5 + $0x8] sm:$0xf]
        %v738 = vld [vmem:[%s5 + $0xc] sm:$0xff]
        %v739 = vld [vmem:[%s5 + $0x14] sm:$0xf]
        %v740 = vld [vmem:[%s5 + $0x18] sm:$0xff]
        %v741 = vld [vmem:[%s5 + $0x20] sm:$0xf]
        %v742 = vld [vmem:[%s5 + $0x24] sm:$0xff]
        %v743 = vld [vmem:[%s5 + $0x2c] sm:$0xf]
        %v744 = vld [vmem:[%s5 + $0x30] sm:$0xff]
        %v745 = vld [vmem:[%s5 + $0x38] sm:$0xf]
        %v746 = vld [vmem:[%s5 + $0x3c] sm:$0xff]
        %v747 = vld [vmem:[%s5 + $0x44] sm:$0xf]
        %v748 = vld [vmem:[%s5 + $0x48] sm:$0xff]
        %v749 = vld [vmem:[%s5 + $0x50] sm:$0xf]
        %v750 = vld [vmem:[%s5 + $0x54] sm:$0xff]
        %v751 = vld [vmem:[%s5 + $0x5c] sm:$0xf]
        %v752 = vld [vmem:[%s5 + $0x60] sm:$0xff]
        %v753 = vld [vmem:[%s5 + $0x68] sm:$0xf]
        %v754 = vld [vmem:[%s5 + $0x6c] sm:$0xff]
        %v755 = vld [vmem:[%s5 + $0x74] sm:$0xf]
        %v756 = vld [vmem:[%s5 + $0x78] sm:$0xff]
        %v757 = vld [vmem:[%s5 + $0x80] sm:$0xf]
        %v758 = vld [vmem:[%s5 + $0x84] sm:$0xff]
        %v759 = vld [vmem:[%s5 + $0x8c] sm:$0xf]
        %v760 = vld [vmem:[%s5 + $0x90] sm:$0xff]
        %v761 = vld [vmem:[%s5 + $0x98] sm:$0xf]
        %v762 = vld [vmem:[%s5 + $0x9c] sm:$0xff]
        %v763 = vld [vmem:[%s5 + $0xa4] sm:$0xf]
        %v764 = vld [vmem:[%s5 + $0xa8] sm:$0xff]
        %v765 = vld [vmem:[%s5 + $0xb0] sm:$0xf]
        %v766 = vld [vmem:[%s5 + $0xb4] sm:$0xff]
        %v767 = vld [vmem:[%s5 + $0xbc] sm:$0xf]
        %v768 = vld [vmem:[%s6] sm:$0x1]
        %v770 = vlaneseq
        %v771 = vshrl.u32 %v770, 7
        %v772 = vsub.s32 0, %v771
        %v773 = vrot.slane %v768, %v772
        %v775 = vld [vmem:[%s344] sm:$0xff]
        %v776 = vld [vmem:[%s344 + $0x8] sm:$0xff]
        %v777 = vld [vmem:[#allocation2] sm:$0xff]
        %v778 = vld [vmem:[#allocation2 + $0x8] sm:$0xff]
        %v779 = vpack.c.bf16 %v778, %v777
        %v812 = vunpack.c.l.b16 %v736
        %v813 = vunpack.c.h.b16 %v736
        %v814 = vunpack.c.l.b16 %v737
        %v815 = vunpack.c.l.b16 %v738
        %v816 = vunpack.c.h.b16 %v738
        %v817 = vunpack.c.l.b16 %v739
        %v818 = vunpack.c.l.b16 %v740
        %v819 = vunpack.c.h.b16 %v740
        %v820 = vunpack.c.l.b16 %v741
        %v821 = vunpack.c.l.b16 %v742
        %v822 = vunpack.c.h.b16 %v742
        %v823 = vunpack.c.l.b16 %v743
        %v824 = vunpack.c.l.b16 %v744
        %v825 = vunpack.c.h.b16 %v744
        %v826 = vunpack.c.l.b16 %v745
        %v827 = vunpack.c.l.b16 %v746
        %v828 = vunpack.c.h.b16 %v746
        %v829 = vunpack.c.l.b16 %v747
        %v830 = vunpack.c.l.b16 %v748
        %v831 = vunpack.c.h.b16 %v748
        %v832 = vunpack.c.l.b16 %v749
        %v833 = vunpack.c.l.b16 %v750
        %v834 = vunpack.c.h.b16 %v750
        %v835 = vunpack.c.l.b16 %v751
        %v836 = vunpack.c.l.b16 %v752
        %v837 = vunpack.c.h.b16 %v752
        %v838 = vunpack.c.l.b16 %v753
        %v839 = vunpack.c.l.b16 %v754
        %v840 = vunpack.c.h.b16 %v754
        %v841 = vunpack.c.l.b16 %v755
        %v842 = vunpack.c.l.b16 %v756
        %v843 = vunpack.c.h.b16 %v756
        %v844 = vunpack.c.l.b16 %v757
        %v845 = vunpack.c.l.b16 %v758
        %v846 = vunpack.c.h.b16 %v758
        %v847 = vunpack.c.l.b16 %v759
        %v848 = vunpack.c.l.b16 %v760
        %v849 = vunpack.c.h.b16 %v760
        %v850 = vunpack.c.l.b16 %v761
        %v851 = vunpack.c.l.b16 %v762
        %v852 = vunpack.c.h.b16 %v762
        %v853 = vunpack.c.l.b16 %v763
        %v854 = vunpack.c.l.b16 %v764
        %v855 = vunpack.c.h.b16 %v764
        %v856 = vunpack.c.l.b16 %v765
        %v857 = vunpack.c.l.b16 %v766
        %v858 = vunpack.c.h.b16 %v766
        %v859 = vunpack.c.l.b16 %v767
        %v860 = vpack.c.b16 %v815, %v812
        %v861 = vpack.c.b16 %v816, %v813
        %v862 = vpack.c.b16 %v817, %v814
        %v863 = vpack.c.b16 %v821, %v818
        %v864 = vpack.c.b16 %v822, %v819
        %v865 = vpack.c.b16 %v823, %v820
        %v866 = vpack.c.b16 %v827, %v824
        %v867 = vpack.c.b16 %v828, %v825
        %v868 = vpack.c.b16 %v829, %v826
        %v869 = vpack.c.b16 %v833, %v830
        %v870 = vpack.c.b16 %v834, %v831
        %v871 = vpack.c.b16 %v835, %v832
        %v872 = vpack.c.b16 %v839, %v836
        %v873 = vpack.c.b16 %v840, %v837
        %v874 = vpack.c.b16 %v841, %v838
        %v875 = vpack.c.b16 %v845, %v842
        %v876 = vpack.c.b16 %v846, %v843
        %v877 = vpack.c.b16 %v847, %v844
        %v878 = vpack.c.b16 %v851, %v848
        %v879 = vpack.c.b16 %v852, %v849
        %v880 = vpack.c.b16 %v853, %v850
        %v881 = vpack.c.b16 %v857, %v854
        %v882 = vpack.c.b16 %v858, %v855
        %v883 = vpack.c.b16 %v859, %v856
        %908 = vmatprep.subr.bf16.mxu0 %v861
        %909 = vmatpush1.bf16.msra.mxu0 %v860
        %910 = vmatprep.subr.bf16.mxu0 %v864
        %911 = vmatpush1.bf16.msra.mxu0 %v863
        %912 = vmatprep.subr.bf16.mxu0 %v867
        %913 = vmatpush1.bf16.msra.mxu0 %v866
        %914 = vmatprep.subr.bf16.mxu0 %v870
        %915 = vmatpush1.bf16.msra.mxu0 %v869
        %916 = vmatprep.subr.bf16.mxu0 %v873
        %917 = vmatpush1.bf16.msra.mxu0 %v872
        %918 = vmatprep.subr.bf16.mxu0 %v876
        %919 = vmatpush1.bf16.msra.mxu0 %v875
        %920 = vmatprep.subr.bf16.mxu0 %v879
        %921 = vmatpush1.bf16.msra.mxu0 %v878
        %922 = vmatprep.subr.bf16.mxu0 %v882
        %923 = vmatpush1.bf16.msra.mxu0 %v881
        %924 = vmatprep.subr.bf16.mxu0 0
        %925 = vmatpush1.bf16.msra.mxu0 0
        %926 = vmatprep.subr.bf16.mxu0 0
        %927 = vmatpush1.bf16.msra.mxu0 0
        %928 = vmatprep.subr.bf16.mxu0 0
        %929 = vmatpush1.bf16.msra.mxu0 0
        %930 = vmatprep.subr.bf16.mxu0 0
        %931 = vmatpush1.bf16.msra.mxu0 0
        %932 = vmatprep.subr.bf16.mxu0 0
        %933 = vmatpush1.bf16.msra.mxu0 0
        %934 = vmatprep.subr.bf16.mxu0 0
        %935 = vmatpush1.bf16.msra.mxu0 0
        %936 = vmatprep.subr.bf16.mxu0 0
        %937 = vmatpush1.bf16.msra.mxu0 0
        %938 = vmatprep.subr.bf16.mxu0 0
        %939 = vmatpush1.bf16.msra.mxu0 0
        %940 = vmatprep.mubr.bf16.mxu0 0
        %941 = vmatmul.mubr.bf16.gmra.mrb[0].mxu0 %v779
        %v942 = vpop.f32.mrb[0].mxu0
        %v943 = vadd.f32 0.0, %v942
        %v944 = vpop.f32.mrb[0].mxu0
        %v945 = vadd.f32 0.0, %v944
        %v946 = vpop.f32.mrb[0].mxu0
        %v947 = vadd.f32 0.0, %v946
        %v948 = vpop.f32.mrb[0].mxu0
        %v949 = vadd.f32 0.0, %v948
        %950 = vdwg.mxu0
        %951 = vmatprep.subr.bf16.mxu0 0
        %952 = vmatpush1.bf16.msra.mxu0 %v862
        %953 = vmatprep.subr.bf16.mxu0 0
        %954 = vmatpush1.bf16.msra.mxu0 %v865
        %955 = vmatprep.subr.bf16.mxu0 0
        %956 = vmatpush1.bf16.msra.mxu0 %v868
        %957 = vmatprep.subr.bf16.mxu0 0
        %958 = vmatpush1.bf16.msra.mxu0 %v871
        %959 = vmatprep.subr.bf16.mxu0 0
        %960 = vmatpush1.bf16.msra.mxu0 %v874
        %961 = vmatprep.subr.bf16.mxu0 0
        %962 = vmatpush1.bf16.msra.mxu0 %v877
        %963 = vmatprep.subr.bf16.mxu0 0
        %964 = vmatpush1.bf16.msra.mxu0 %v880
        %965 = vmatprep.subr.bf16.mxu0 0
        %966 = vmatpush1.bf16.msra.mxu0 %v883
        %967 = vmatprep.subr.bf16.mxu0 0
        %968 = vmatpush1.bf16.msra.mxu0 0
        %969 = vmatprep.subr.bf16.mxu0 0
        %970 = vmatpush1.bf16.msra.mxu0 0
        %971 = vmatprep.subr.bf16.mxu0 0
        %972 = vmatpush1.bf16.msra.mxu0 0
        %973 = vmatprep.subr.bf16.mxu0 0
        %974 = vmatpush1.bf16.msra.mxu0 0
        %975 = vmatprep.subr.bf16.mxu0 0
        %976 = vmatpush1.bf16.msra.mxu0 0
        %977 = vmatprep.subr.bf16.mxu0 0
        %978 = vmatpush1.bf16.msra.mxu0 0
        %979 = vmatprep.subr.bf16.mxu0 0
        %980 = vmatpush1.bf16.msra.mxu0 0
        %981 = vmatprep.subr.bf16.mxu0 0
        %982 = vmatpush1.bf16.msra.mxu0 0
        %983 = vmatprep.mubr.bf16.mxu0 0
        %984 = vmatmul.mubr.bf16.gmra.mrb[0].mxu0 %v779
        %v985 = vpop.f32.mrb[0].mxu0
        %v986 = vadd.f32 0.0, %v985
        %v987 = vpop.f32.mrb[0].mxu0
        %v988 = vpop.f32.mrb[0].mxu0
        %v989 = vadd.f32 0.0, %v988
        %v990 = vpop.f32.mrb[0].mxu0
        %991 = vdwg.mxu0
        %v992 = vadd.f32 %v633, %v943
        %v993 = vadd.f32 %v637, %v947
        %v994 = vxor.u32 %v992, 2147483648
        %v995 = vxor.u32 %v993, 2147483648
        %v996 = vmul.f32 %v994, 1.442695
        %v997 = vpow.pop %v996
        %v998 = vmul.f32 %v995, 1.442695
        %v999 = vpow.pop %v998
        %v1000 = vadd.f32 %v997, 1.0
        %v1001 = vadd.f32 %v999, 1.0
        %v1002 = vrcp.pop %v1000
        %v1003 = vmul.f32 1.0, %v1002
        %v1004 = vrcp.pop %v1001
        %v1005 = vmul.f32 1.0, %v1004
        %v1006 = vadd.f32 %v635, %v945
        %v1007 = vadd.f32 %v639, %v949
        %v1008 = vxor.u32 %v1006, 2147483648
        %v1009 = vxor.u32 %v1007, 2147483648
        %v1010 = vmul.f32 %v1008, 1.442695
        %v1011 = vpow.pop %v1010
        %v1012 = vmul.f32 %v1009, 1.442695
        %v1013 = vpow.pop %v1012
        %v1014 = vadd.f32 %v1011, 1.0
        %v1015 = vadd.f32 %v1013, 1.0
        %v1016 = vrcp.pop %v1014
        %v1017 = vmul.f32 1.0, %v1016
        %v1018 = vrcp.pop %v1015
        %v1019 = vmul.f32 1.0, %v1018
        %v1020 = vadd.f32 %v986, %v773
        %v1021 = vadd.f32 %v989, %v773
        %v1022 = vmul.f32 %v1003, %v1020
        %v1023 = vmul.f32 %v1005, %v1021
        %v1024 = vadd.f32 %v706, %v1022
        %v1025 = vadd.f32 %v709, %v1023
        %v1026 = vtanh.pop %v1024
        %v1027 = vtanh.pop %v1025
        %v1028 = vsub.f32 %v777, %v1026
        %v1029 = vsub.f32 %v778, %v1027
        %v1030 = vmul.f32 %v1017, %v1028
        %v1031 = vmul.f32 %v1019, %v1029
        %v1032 = vadd.f32 %v1026, %v1030
        %v1033 = vadd.f32 %v1027, %v1031
        %v1034 = vstv %s365
        %vm1035 = vcmp.gt.s32.totalorder %v775, %v1034
        %vm1036 = vcmp.gt.s32.totalorder %v776, %v1034
        %v1037 = vsel %vm1035, %v1032, 0.0
        %v1038 = vsel %vm1036, %v1033, 0.0
        %1039 = vst [vmem:[%s355] sm:$0xff] %v1037
        %1040 = vst [vmem:[%s355 + $0x8] sm:$0xff] %v1038
        %v1041 = vsel %vm1035, %v1032, %v777
        %v1042 = vsel %vm1036, %v1033, %v778
        %v1043 = vpack.c.bf16 %v1042, %v1041
        %1044 = vmatprep.subr.bf16.mxu0 %v861
        %1045 = vmatpush1.bf16.msra.mxu0 %v860
        %1046 = vmatprep.subr.bf16.mxu0 %v864
        %1047 = vmatpush1.bf16.msra.mxu0 %v863
        %1048 = vmatprep.subr.bf16.mxu0 %v867
        %1049 = vmatpush1.bf16.msra.mxu0 %v866
        %1050 = vmatprep.subr.bf16.mxu0 %v870
        %1051 = vmatpush1.bf16.msra.mxu0 %v869
        %1052 = vmatprep.subr.bf16.mxu0 %v873
        %1053 = vmatpush1.bf16.msra.mxu0 %v872
        %1054 = vmatprep.subr.bf16.mxu0 %v876
        %1055 = vmatpush1.bf16.msra.mxu0 %v875
        %1056 = vmatprep.subr.bf16.mxu0 %v879
        %1057 = vmatpush1.bf16.msra.mxu0 %v878
        %1058 = vmatprep.subr.bf16.mxu0 %v882
        %1059 = vmatpush1.bf16.msra.mxu0 %v881
        %1060 = vmatprep.subr.bf16.mxu0 0
        %1061 = vmatpush1.bf16.msra.mxu0 0
        %1062 = vmatprep.subr.bf16.mxu0 0
        %1063 = vmatpush1.bf16.msra.mxu0 0
        %1064 = vmatprep.subr.bf16.mxu0 0
        %1065 = vmatpush1.bf16.msra.mxu0 0
        %1066 = vmatprep.subr.bf16.mxu0 0
        %1067 = vmatpush1.bf16.msra.mxu0 0
        %1068 = vmatprep.subr.bf16.mxu0 0
        %1069 = vmatpush1.bf16.msra.mxu0 0
        %1070 = vmatprep.subr.bf16.mxu0 0
        %1071 = vmatpush1.bf16.msra.mxu0 0
        %1072 = vmatprep.subr.bf16.mxu0 0
        %1073 = vmatpush1.bf16.msra.mxu0 0
        %1074 = vmatprep.subr.bf16.mxu0 0
        %1075 = vmatpush1.bf16.msra.mxu0 0
        %1076 = vmatprep.mubr.bf16.mxu0 0
        %1077 = vmatmul.mubr.bf16.gmra.mrb[0].mxu0 %v1043
        %v1078 = vpop.f32.mrb[0].mxu0
        %v1079 = vadd.f32 0.0, %v1078
        %v1080 = vpop.f32.mrb[0].mxu0
        %v1081 = vadd.f32 0.0, %v1080
        %v1082 = vpop.f32.mrb[0].mxu0
        %v1083 = vadd.f32 0.0, %v1082
        %v1084 = vpop.f32.mrb[0].mxu0
        %v1085 = vadd.f32 0.0, %v1084
        %1086 = vdwg.mxu0
        %1087 = vmatprep.subr.bf16.mxu0 0
        %1088 = vmatpush1.bf16.msra.mxu0 %v862
        %1089 = vmatprep.subr.bf16.mxu0 0
        %1090 = vmatpush1.bf16.msra.mxu0 %v865
        %1091 = vmatprep.subr.bf16.mxu0 0
        %1092 = vmatpush1.bf16.msra.mxu0 %v868
        %1093 = vmatprep.subr.bf16.mxu0 0
        %1094 = vmatpush1.bf16.msra.mxu0 %v871
        %1095 = vmatprep.subr.bf16.mxu0 0
        %1096 = vmatpush1.bf16.msra.mxu0 %v874
        %1097 = vmatprep.subr.bf16.mxu0 0
        %1098 = vmatpush1.bf16.msra.mxu0 %v877
        %1099 = vmatprep.subr.bf16.mxu0 0
        %1100 = vmatpush1.bf16.msra.mxu0 %v880
        %1101 = vmatprep.subr.bf16.mxu0 0
        %1102 = vmatpush1.bf16.msra.mxu0 %v883
        %1103 = vmatprep.subr.bf16.mxu0 0
        %1104 = vmatpush1.bf16.msra.mxu0 0
        %1105 = vmatprep.subr.bf16.mxu0 0
        %1106 = vmatpush1.bf16.msra.mxu0 0
        %1107 = vmatprep.subr.bf16.mxu0 0
        %1108 = vmatpush1.bf16.msra.mxu0 0
        %1109 = vmatprep.subr.bf16.mxu0 0
        %1110 = vmatpush1.bf16.msra.mxu0 0
        %1111 = vmatprep.subr.bf16.mxu0 0
        %1112 = vmatpush1.bf16.msra.mxu0 0
        %1113 = vmatprep.subr.bf16.mxu0 0
        %1114 = vmatpush1.bf16.msra.mxu0 0
        %1115 = vmatprep.subr.bf16.mxu0 0
        %1116 = vmatpush1.bf16.msra.mxu0 0
        %1117 = vmatprep.subr.bf16.mxu0 0
        %1118 = vmatpush1.bf16.msra.mxu0 0
        %1119 = vmatprep.mubr.bf16.mxu0 0
        %1120 = vmatmul.mubr.bf16.gmra.mrb[0].mxu0 %v1043
        %v1121 = vpop.f32.mrb[0].mxu0
        %v1122 = vadd.f32 0.0, %v1121
        %v1123 = vpop.f32.mrb[0].mxu0
        %v1124 = vpop.f32.mrb[0].mxu0
        %v1125 = vadd.f32 0.0, %v1124
        %v1126 = vpop.f32.mrb[0].mxu0
        %1127 = vdwg.mxu0
        %v1128 = vadd.f32 %v643, %v1079
        %v1129 = vadd.f32 %v647, %v1083
        %v1130 = vxor.u32 %v1128, 2147483648
        %v1131 = vxor.u32 %v1129, 2147483648
        %v1132 = vmul.f32 %v1130, 1.442695
        %v1133 = vpow.pop %v1132
        %v1134 = vmul.f32 %v1131, 1.442695
        %v1135 = vpow.pop %v1134
        %v1136 = vadd.f32 %v1133, 1.0
        %v1137 = vadd.f32 %v1135, 1.0
        %v1138 = vrcp.pop %v1136
        %v1139 = vmul.f32 1.0, %v1138
        %v1140 = vrcp.pop %v1137
        %v1141 = vmul.f32 1.0, %v1140
        %v1142 = vadd.f32 %v645, %v1081
        %v1143 = vadd.f32 %v649, %v1085
        %v1144 = vxor.u32 %v1142, 2147483648
        %v1145 = vxor.u32 %v1143, 2147483648
        %v1146 = vmul.f32 %v1144, 1.442695
        %v1147 = vpow.pop %v1146
        %v1148 = vmul.f32 %v1145, 1.442695
        %v1149 = vpow.pop %v1148
        %v1150 = vadd.f32 %v1147, 1.0
        %v1151 = vadd.f32 %v1149, 1.0
        %v1152 = vrcp.pop %v1150
        %v1153 = vmul.f32 1.0, %v1152
        %v1154 = vrcp.pop %v1151
        %v1155 = vmul.f32 1.0, %v1154
        %v1156 = vadd.f32 %v1122, %v773
        %v1157 = vadd.f32 %v1125, %v773
        %v1158 = vmul.f32 %v1139, %v1156
        %v1159 = vmul.f32 %v1141, %v1157
        %v1160 = vadd.f32 %v714, %v1158
        %v1161 = vadd.f32 %v717, %v1159
        %v1162 = vtanh.pop %v1160
        %v1163 = vtanh.pop %v1161
        %v1164 = vsub.f32 %v1041, %v1162
        %v1165 = vsub.f32 %v1042, %v1163
        %v1166 = vmul.f32 %v1153, %v1164
        %v1167 = vmul.f32 %v1155, %v1165
        %v1168 = vadd.f32 %v1162, %v1166
        %v1169 = vadd.f32 %v1163, %v1167
        %s1170 = sadd.s32 %s365, 1
        %v1171 = vstv %s1170
        %vm1172 = vcmp.gt.s32.totalorder %v775, %v1171
        %vm1173 = vcmp.gt.s32.totalorder %v776, %v1171
        %v1174 = vsel %vm1172, %v1168, 0.0
        %v1175 = vsel %vm1173, %v1169, 0.0
        %s1176 = scalar_lea.vmem %s355, 16
        %1177 = vst [vmem:[%s1176] sm:$0xff] %v1174
        %1178 = vst [vmem:[%s1176 + $0x8] sm:$0xff] %v1175
        %v1179 = vsel %vm1172, %v1168, %v1041
        %v1180 = vsel %vm1173, %v1169, %v1042
        %v1181 = vpack.c.bf16 %v1180, %v1179
        %1182 = vmatprep.subr.bf16.mxu0 %v861
        %1183 = vmatpush1.bf16.msra.mxu0 %v860
        %1184 = vmatprep.subr.bf16.mxu0 %v864
        %1185 = vmatpush1.bf16.msra.mxu0 %v863
        %1186 = vmatprep.subr.bf16.mxu0 %v867
        %1187 = vmatpush1.bf16.msra.mxu0 %v866
        %1188 = vmatprep.subr.bf16.mxu0 %v870
        %1189 = vmatpush1.bf16.msra.mxu0 %v869
        %1190 = vmatprep.subr.bf16.mxu0 %v873
        %1191 = vmatpush1.bf16.msra.mxu0 %v872
        %1192 = vmatprep.subr.bf16.mxu0 %v876
        %1193 = vmatpush1.bf16.msra.mxu0 %v875
        %1194 = vmatprep.subr.bf16.mxu0 %v879
        %1195 = vmatpush1.bf16.msra.mxu0 %v878
        %1196 = vmatprep.subr.bf16.mxu0 %v882
        %1197 = vmatpush1.bf16.msra.mxu0 %v881
        %1198 = vmatprep.subr.bf16.mxu0 0
        %1199 = vmatpush1.bf16.msra.mxu0 0
        %1200 = vmatprep.subr.bf16.mxu0 0
        %1201 = vmatpush1.bf16.msra.mxu0 0
        %1202 = vmatprep.subr.bf16.mxu0 0
        %1203 = vmatpush1.bf16.msra.mxu0 0
        %1204 = vmatprep.subr.bf16.mxu0 0
        %1205 = vmatpush1.bf16.msra.mxu0 0
        %1206 = vmatprep.subr.bf16.mxu0 0
        %1207 = vmatpush1.bf16.msra.mxu0 0
        %1208 = vmatprep.subr.bf16.mxu0 0
        %1209 = vmatpush1.bf16.msra.mxu0 0
        %1210 = vmatprep.subr.bf16.mxu0 0
        %1211 = vmatpush1.bf16.msra.mxu0 0
        %1212 = vmatprep.subr.bf16.mxu0 0
        %1213 = vmatpush1.bf16.msra.mxu0 0
        %1214 = vmatprep.mubr.bf16.mxu0 0
        %1215 = vmatmul.mubr.bf16.gmra.mrb[0].mxu0 %v1181
        %v1216 = vpop.f32.mrb[0].mxu0
        %v1217 = vadd.f32 0.0, %v1216
        %v1218 = vpop.f32.mrb[0].mxu0
        %v1219 = vadd.f32 0.0, %v1218
        %v1220 = vpop.f32.mrb[0].mxu0
        %v1221 = vadd.f32 0.0, %v1220
        %v1222 = vpop.f32.mrb[0].mxu0
        %v1223 = vadd.f32 0.0, %v1222
        %1224 = vdwg.mxu0
        %1225 = vmatprep.subr.bf16.mxu0 0
        %1226 = vmatpush1.bf16.msra.mxu0 %v862
        %1227 = vmatprep.subr.bf16.mxu0 0
        %1228 = vmatpush1.bf16.msra.mxu0 %v865
        %1229 = vmatprep.subr.bf16.mxu0 0
        %1230 = vmatpush1.bf16.msra.mxu0 %v868
        %1231 = vmatprep.subr.bf16.mxu0 0
        %1232 = vmatpush1.bf16.msra.mxu0 %v871
        %1233 = vmatprep.subr.bf16.mxu0 0
        %1234 = vmatpush1.bf16.msra.mxu0 %v874
        %1235 = vmatprep.subr.bf16.mxu0 0
        %1236 = vmatpush1.bf16.msra.mxu0 %v877
        %1237 = vmatprep.subr.bf16.mxu0 0
        %1238 = vmatpush1.bf16.msra.mxu0 %v880
        %1239 = vmatprep.subr.bf16.mxu0 0
        %1240 = vmatpush1.bf16.msra.mxu0 %v883
        %1241 = vmatprep.subr.bf16.mxu0 0
        %1242 = vmatpush1.bf16.msra.mxu0 0
        %1243 = vmatprep.subr.bf16.mxu0 0
        %1244 = vmatpush1.bf16.msra.mxu0 0
        %1245 = vmatprep.subr.bf16.mxu0 0
        %1246 = vmatpush1.bf16.msra.mxu0 0
        %1247 = vmatprep.subr.bf16.mxu0 0
        %1248 = vmatpush1.bf16.msra.mxu0 0
        %1249 = vmatprep.subr.bf16.mxu0 0
        %1250 = vmatpush1.bf16.msra.mxu0 0
        %1251 = vmatprep.subr.bf16.mxu0 0
        %1252 = vmatpush1.bf16.msra.mxu0 0
        %1253 = vmatprep.subr.bf16.mxu0 0
        %1254 = vmatpush1.bf16.msra.mxu0 0
        %1255 = vmatprep.subr.bf16.mxu0 0
        %1256 = vmatpush1.bf16.msra.mxu0 0
        %1257 = vmatprep.mubr.bf16.mxu0 0
        %1258 = vmatmul.mubr.bf16.gmra.mrb[0].mxu0 %v1181
        %v1259 = vpop.f32.mrb[0].mxu0
        %v1260 = vadd.f32 0.0, %v1259
        %v1261 = vpop.f32.mrb[0].mxu0
        %v1262 = vpop.f32.mrb[0].mxu0
        %v1263 = vadd.f32 0.0, %v1262
        %v1264 = vpop.f32.mrb[0].mxu0
        %1265 = vdwg.mxu0
        %v1266 = vadd.f32 %v653, %v1217
        %v1267 = vadd.f32 %v657, %v1221
        %v1268 = vxor.u32 %v1266, 2147483648
        %v1269 = vxor.u32 %v1267, 2147483648
        %v1270 = vmul.f32 %v1268, 1.442695
        %v1271 = vpow.pop %v1270
        %v1272 = vmul.f32 %v1269, 1.442695
        %v1273 = vpow.pop %v1272
        %v1274 = vadd.f32 %v1271, 1.0
        %v1275 = vadd.f32 %v1273, 1.0
        %v1276 = vrcp.pop %v1274
        %v1277 = vmul.f32 1.0, %v1276
        %v1278 = vrcp.pop %v1275
        %v1279 = vmul.f32 1.0, %v1278
        %v1280 = vadd.f32 %v655, %v1219
        %v1281 = vadd.f32 %v659, %v1223
        %v1282 = vxor.u32 %v1280, 2147483648
        %v1283 = vxor.u32 %v1281, 2147483648
        %v1284 = vmul.f32 %v1282, 1.442695
        %v1285 = vpow.pop %v1284
        %v1286 = vmul.f32 %v1283, 1.442695
        %v1287 = vpow.pop %v1286
        %v1288 = vadd.f32 %v1285, 1.0
        %v1289 = vadd.f32 %v1287, 1.0
        %v1290 = vrcp.pop %v1288
        %v1291 = vmul.f32 1.0, %v1290
        %v1292 = vrcp.pop %v1289
        %v1293 = vmul.f32 1.0, %v1292
        %v1294 = vadd.f32 %v1260, %v773
        %v1295 = vadd.f32 %v1263, %v773
        %v1296 = vmul.f32 %v1277, %v1294
        %v1297 = vmul.f32 %v1279, %v1295
        %v1298 = vadd.f32 %v722, %v1296
        %v1299 = vadd.f32 %v725, %v1297
        %v1300 = vtanh.pop %v1298
        %v1301 = vtanh.pop %v1299
        %v1302 = vsub.f32 %v1179, %v1300
        %v1303 = vsub.f32 %v1180, %v1301
        %v1304 = vmul.f32 %v1291, %v1302
        %v1305 = vmul.f32 %v1293, %v1303
        %v1306 = vadd.f32 %v1300, %v1304
        %v1307 = vadd.f32 %v1301, %v1305
        %s1308 = sadd.s32 %s365, 2
        %v1309 = vstv %s1308
        %vm1310 = vcmp.gt.s32.totalorder %v775, %v1309
        %vm1311 = vcmp.gt.s32.totalorder %v776, %v1309
        %v1312 = vsel %vm1310, %v1306, 0.0
        %v1313 = vsel %vm1311, %v1307, 0.0
        %s1314 = scalar_lea.vmem %s355, 32
        %1315 = vst [vmem:[%s1314] sm:$0xff] %v1312
        %1316 = vst [vmem:[%s1314 + $0x8] sm:$0xff] %v1313
        %v1317 = vsel %vm1310, %v1306, %v1179
        %v1318 = vsel %vm1311, %v1307, %v1180
        %v1319 = vpack.c.bf16 %v1318, %v1317
        %1320 = vmatprep.subr.bf16.mxu0 %v861
        %1321 = vmatpush1.bf16.msra.mxu0 %v860
        %1322 = vmatprep.subr.bf16.mxu0 %v864
        %1323 = vmatpush1.bf16.msra.mxu0 %v863
        %1324 = vmatprep.subr.bf16.mxu0 %v867
        %1325 = vmatpush1.bf16.msra.mxu0 %v866
        %1326 = vmatprep.subr.bf16.mxu0 %v870
        %1327 = vmatpush1.bf16.msra.mxu0 %v869
        %1328 = vmatprep.subr.bf16.mxu0 %v873
        %1329 = vmatpush1.bf16.msra.mxu0 %v872
        %1330 = vmatprep.subr.bf16.mxu0 %v876
        %1331 = vmatpush1.bf16.msra.mxu0 %v875
        %1332 = vmatprep.subr.bf16.mxu0 %v879
        %1333 = vmatpush1.bf16.msra.mxu0 %v878
        %1334 = vmatprep.subr.bf16.mxu0 %v882
        %1335 = vmatpush1.bf16.msra.mxu0 %v881
        %1336 = vmatprep.subr.bf16.mxu0 0
        %1337 = vmatpush1.bf16.msra.mxu0 0
        %1338 = vmatprep.subr.bf16.mxu0 0
        %1339 = vmatpush1.bf16.msra.mxu0 0
        %1340 = vmatprep.subr.bf16.mxu0 0
        %1341 = vmatpush1.bf16.msra.mxu0 0
        %1342 = vmatprep.subr.bf16.mxu0 0
        %1343 = vmatpush1.bf16.msra.mxu0 0
        %1344 = vmatprep.subr.bf16.mxu0 0
        %1345 = vmatpush1.bf16.msra.mxu0 0
        %1346 = vmatprep.subr.bf16.mxu0 0
        %1347 = vmatpush1.bf16.msra.mxu0 0
        %1348 = vmatprep.subr.bf16.mxu0 0
        %1349 = vmatpush1.bf16.msra.mxu0 0
        %1350 = vmatprep.subr.bf16.mxu0 0
        %1351 = vmatpush1.bf16.msra.mxu0 0
        %1352 = vmatprep.mubr.bf16.mxu0 0
        %1353 = vmatmul.mubr.bf16.gmra.mrb[0].mxu0 %v1319
        %v1354 = vpop.f32.mrb[0].mxu0
        %v1355 = vadd.f32 0.0, %v1354
        %v1356 = vpop.f32.mrb[0].mxu0
        %v1357 = vadd.f32 0.0, %v1356
        %v1358 = vpop.f32.mrb[0].mxu0
        %v1359 = vadd.f32 0.0, %v1358
        %v1360 = vpop.f32.mrb[0].mxu0
        %v1361 = vadd.f32 0.0, %v1360
        %1362 = vdwg.mxu0
        %1363 = vmatprep.subr.bf16.mxu0 0
        %1364 = vmatpush1.bf16.msra.mxu0 %v862
        %1365 = vmatprep.subr.bf16.mxu0 0
        %1366 = vmatpush1.bf16.msra.mxu0 %v865
        %1367 = vmatprep.subr.bf16.mxu0 0
        %1368 = vmatpush1.bf16.msra.mxu0 %v868
        %1369 = vmatprep.subr.bf16.mxu0 0
        %1370 = vmatpush1.bf16.msra.mxu0 %v871
        %1371 = vmatprep.subr.bf16.mxu0 0
        %1372 = vmatpush1.bf16.msra.mxu0 %v874
        %1373 = vmatprep.subr.bf16.mxu0 0
        %1374 = vmatpush1.bf16.msra.mxu0 %v877
        %1375 = vmatprep.subr.bf16.mxu0 0
        %1376 = vmatpush1.bf16.msra.mxu0 %v880
        %1377 = vmatprep.subr.bf16.mxu0 0
        %1378 = vmatpush1.bf16.msra.mxu0 %v883
        %1379 = vmatprep.subr.bf16.mxu0 0
        %1380 = vmatpush1.bf16.msra.mxu0 0
        %1381 = vmatprep.subr.bf16.mxu0 0
        %1382 = vmatpush1.bf16.msra.mxu0 0
        %1383 = vmatprep.subr.bf16.mxu0 0
        %1384 = vmatpush1.bf16.msra.mxu0 0
        %1385 = vmatprep.subr.bf16.mxu0 0
        %1386 = vmatpush1.bf16.msra.mxu0 0
        %1387 = vmatprep.subr.bf16.mxu0 0
        %1388 = vmatpush1.bf16.msra.mxu0 0
        %1389 = vmatprep.subr.bf16.mxu0 0
        %1390 = vmatpush1.bf16.msra.mxu0 0
        %1391 = vmatprep.subr.bf16.mxu0 0
        %1392 = vmatpush1.bf16.msra.mxu0 0
        %1393 = vmatprep.subr.bf16.mxu0 0
        %1394 = vmatpush1.bf16.msra.mxu0 0
        %1395 = vmatprep.mubr.bf16.mxu0 0
        %1396 = vmatmul.mubr.bf16.gmra.mrb[0].mxu0 %v1319
        %v1397 = vpop.f32.mrb[0].mxu0
        %v1398 = vadd.f32 0.0, %v1397
        %v1399 = vpop.f32.mrb[0].mxu0
        %v1400 = vpop.f32.mrb[0].mxu0
        %v1401 = vadd.f32 0.0, %v1400
        %v1402 = vpop.f32.mrb[0].mxu0
        %1403 = vdwg.mxu0
        %v1404 = vadd.f32 %v663, %v1355
        %v1405 = vadd.f32 %v667, %v1359
        %v1406 = vxor.u32 %v1404, 2147483648
        %v1407 = vxor.u32 %v1405, 2147483648
        %v1408 = vmul.f32 %v1406, 1.442695
        %v1409 = vpow.pop %v1408
        %v1410 = vmul.f32 %v1407, 1.442695
        %v1411 = vpow.pop %v1410
        %v1412 = vadd.f32 %v1409, 1.0
        %v1413 = vadd.f32 %v1411, 1.0
        %v1414 = vrcp.pop %v1412
        %v1415 = vmul.f32 1.0, %v1414
        %v1416 = vrcp.pop %v1413
        %v1417 = vmul.f32 1.0, %v1416
        %v1418 = vadd.f32 %v665, %v1357
        %v1419 = vadd.f32 %v669, %v1361
        %v1420 = vxor.u32 %v1418, 2147483648
        %v1421 = vxor.u32 %v1419, 2147483648
        %v1422 = vmul.f32 %v1420, 1.442695
        %v1423 = vpow.pop %v1422
        %v1424 = vmul.f32 %v1421, 1.442695
        %v1425 = vpow.pop %v1424
        %v1426 = vadd.f32 %v1423, 1.0
        %v1427 = vadd.f32 %v1425, 1.0
        %v1428 = vrcp.pop %v1426
        %v1429 = vmul.f32 1.0, %v1428
        %v1430 = vrcp.pop %v1427
        %v1431 = vmul.f32 1.0, %v1430
        %v1432 = vadd.f32 %v1398, %v773
        %v1433 = vadd.f32 %v1401, %v773
        %v1434 = vmul.f32 %v1415, %v1432
        %v1435 = vmul.f32 %v1417, %v1433
        %v1436 = vadd.f32 %v730, %v1434
        %v1437 = vadd.f32 %v733, %v1435
        %v1438 = vtanh.pop %v1436
        %v1439 = vtanh.pop %v1437
        %v1440 = vsub.f32 %v1317, %v1438
        %v1441 = vsub.f32 %v1318, %v1439
        %v1442 = vmul.f32 %v1429, %v1440
        %v1443 = vmul.f32 %v1431, %v1441
        %v1444 = vadd.f32 %v1438, %v1442
        %v1445 = vadd.f32 %v1439, %v1443
        %s1446 = sadd.s32 %s365, 3
        %v1447 = vstv %s1446
        %vm1448 = vcmp.gt.s32.totalorder %v775, %v1447
        %vm1449 = vcmp.gt.s32.totalorder %v776, %v1447
        %v1450 = vsel %vm1448, %v1444, 0.0
        %v1451 = vsel %vm1449, %v1445, 0.0
        %s1452 = scalar_lea.vmem %s355, 48
        %1453 = vst [vmem:[%s1452] sm:$0xff] %v1450
        %1454 = vst [vmem:[%s1452 + $0x8] sm:$0xff] %v1451
        %v1455 = vsel %vm1448, %v1444, %v1317
        %v1456 = vsel %vm1449, %v1445, %v1318
        %1457 = vst [vmem:[#allocation2] sm:$0xff] %v1455
        %1458 = vst [vmem:[#allocation2 + $0x8] sm:$0xff] %v1456
      $region56: #{encoder_forward.1} parent=43 // pred_fallthru
        _
      %p1459 = scmp.eq.s32.totalorder %s26, 1
      // Predicated region
      $region57: #{encoder_forward.1} parent=43 // pred_check
        %p1460 = pneg %p1459
      $region58: #{encoder_forward.1} parent=43 // pred_check_branch
        %1462 = sbr.rel (%p1460) target = $region60
      $region59: #{encoder_forward.1} parent=43 // pred_region
        %v1463 = vld [vmem:[#allocation2] sm:$0xff]
        %v1464 = vld [vmem:[#allocation2 + $0x8] sm:$0xff]
        %1465 = vst [vmem:[%s362] sm:$0xff] %v1463
        %1466 = vst [vmem:[%s362 + $0x8] sm:$0xff] %v1464
      $region60: #{encoder_forward.1} parent=43 // pred_fallthru
        _
      %s1467 = smul.u32 4, %s26
      %s1468 = smul.u32 2, %s25
      %p1469 = scmp.lt.s32.totalorder %s1467, 7
      %s1470 = scalar_select %p1469, %s1467, 7
      %p1471 = scmp.lt.s32.totalorder %s1468, 1
      %s1472 = scalar_select %p1471, %s1468, 1
      %s1473 = smul.addr %s1470, 2
      %s1474 = sadd.s32 %s1472, %s1473
      %s1475 = smul.addr %s1474, 8
      %s1476 = scalar_lea.vmem %s7, %s1475
      %s1477 = smul.u32 2, %s25
      %p1478 = scmp.lt.s32.totalorder %s1477, 1
      %s1479 = scalar_select %p1478, %s1477, 1
      %s1480 = smul.addr %s1479, 8
      %s1481 = scalar_lea.vmem %s8, %s1480
      // Predicated region
      $region61: #{encoder_forward.1} parent=43 // pred_check
        %p1482 = pneg %p191
      $region62: #{encoder_forward.1} parent=43 // pred_check_branch
        %1484 = sbr.rel (%p1482) target = $region64
      $region63: #{encoder_forward.1} parent=43 // pred_region
        %s1485 = smul.u32 4, %s26
        %s1486 = smul.u32 2, %s25
      $region64: #{encoder_forward.1} parent=43 // pred_fallthru
        _
      // Predicated region
      $region65: #{encoder_forward.1} parent=43 // pred_check
        %p1487 = pneg %p217
      $region66: #{encoder_forward.1} parent=43 // pred_check_branch
        %1489 = sbr.rel (%p1487) target = $region68
      $region67: #{encoder_forward.1} parent=43 // pred_region
        %s1490 = smul.u32 2, %s25
      $region68: #{encoder_forward.1} parent=43 // pred_fallthru
        _
      // Predicated region
      $region69: #{encoder_forward.1} parent=43 // pred_check
        %p1491 = pneg %p217
      $region70: #{encoder_forward.1} parent=43 // pred_check_branch
        %1493 = sbr.rel (%p1491) target = $region72
      $region71: #{encoder_forward.1} parent=43 // pred_region
        %s1494 = smul.u32 2, %s25
        %p1495 = scmp.lt.s32.totalorder %s1494, 1
        %s1496 = scalar_select %p1495, %s1494, 1
        %s1497 = smul.addr %s1496, 8
        %s1498 = scalar_lea.vmem %s8, %s1497
      $region72: #{encoder_forward.1} parent=43 // pred_fallthru
        _
    $region44: #{encoder_forward.1} parent=5 // pred_fallthru
      _
    %p1499 = scmp.le.s32.totalorder 2, %s16
    // Predicated region
    $region73: #{encoder_forward.1} parent=5 // pred_check
      %p1500 = pneg %p1499
    $region74: #{encoder_forward.1} parent=5 // pred_check_branch
      %1502 = sbr.rel (%p1500) target = $region76
    $region75: #{encoder_forward.1} parent=5 // pred_region
      %s1503 = ssub.s32 %s16, 2
      // Predicated region
      $region77: #{encoder_forward.1} parent=75 // pred_check
        %p1504 = pneg %p197
      $region78: #{encoder_forward.1} parent=75 // pred_check_branch
        %1506 = sbr.rel (%p1504) target = $region80
      $region79: #{encoder_forward.1} parent=75 // pred_region
        %s1507 = smul.u32 4, %s28
        %s1508 = smul.u32 2, %s27
        %p1509 = scmp.lt.s32.totalorder %s1507, 7
        %s1510 = scalar_select %p1509, %s1507, 7
        %p1511 = scmp.lt.s32.totalorder %s1508, 1
        %s1512 = scalar_select %p1511, %s1508, 1
        %s1513 = smul.addr %s1510, 2
        %s1514 = sadd.s32 %s1512, %s1513
        %s1515 = smul.addr %s1514, 8
        %s1516 = scalar_lea.vmem %s7, %s1515
      $region80: #{encoder_forward.1} parent=75 // pred_fallthru
        _
    $region76: #{encoder_forward.1} parent=5 // pred_fallthru
      _
  $region6: #{encoder_forward.1} parent=0 // loop_footer
    %s20 = sadd.s32 1, %s16
  $region7: #{encoder_forward.1} parent=0 // loop_footer_branch
    %15 = sbr.rel target = $region3
  $region8: #{encoder_forward.1} parent=0 // loop_exit
    _

</llo_original>
